<compile_context>
chip_gen: v7x
topology: tpu7x:2x2x1
jax: 0.10.0
libtpu: 0.0.40
codegen_flags: <defaults>
</compile_context>

<pallas_src>
import math

import jax
import jax.numpy as jnp
import numpy as np
from jax import lax
from jax.experimental import pallas as pl
from jax.experimental.pallas import tpu as pltpu


_CDIMS = (((1,), (1,)), ((), ()))  # contract dim-1 of lhs with dim-1 of rhs


def num_poly_features(d, degree=2):
    return 1 + d + (d * (d + 1)) // 2 if degree >= 2 else 1 + d


# ---------------------------------------------------------------------------
# Pallas kernel: fused poly-features + matmul + mean + covariance + var*I
# for a block of `sb` independent forwards per grid step.
# ---------------------------------------------------------------------------
def _glm_forward_kernel(x_ref, w_ref, var_ref, mu_ref, cov_ref):
    # x_ref   : (sb, B, d) f32  VMEM  -- raw inputs for this block of forwards
    # w_ref   : (n, F)     f32  VMEM  -- reparam weights (NOT transposed), resident
    # var_ref : (1,)       f32  SMEM  -- softplus(invsoftplus_sigma)**2
    # mu_ref  : (sb, 1, B) f32  VMEM  -- lane-dense means
    # cov_ref : (sb, B, B) f32  VMEM
    sb, B, d = x_ref.shape
    w = w_ref[...]                                   # (n, F), F = 1 + d + d(d+1)/2
    n = w.shape[0]
    var = var_ref[0]                                 # SMEM scalar

    inv_n = 1.0 / n
    inv_nm1 = 1.0 / (n - 1)

    # constants shared by every forward in this block (hoisted; JAX does not
    # CSE broadcasts, so do NOT re-create these inside the loop)
    ones_col = jnp.ones((B, 1), jnp.float32)
    ones_row = jnp.ones((1, n), jnp.float32)
    row = lax.broadcasted_iota(jnp.int32, (B, B), 0)
    col = lax.broadcasted_iota(jnp.int32, (B, B), 1)
    diag = row == col

    for s in range(sb):                              # static, small unroll
        x = x_ref[s]                                 # (B, d)

        # --- fused degree-2 polynomial features, contracted against w on the fly.
        # bias column: 1 * w[:, 0]   (ones-contraction doubles as the transpose)
        y_t = lax.dot_general(ones_col, w[:, 0:1], _CDIMS,
                              preferred_element_type=jnp.float32)       # (B, n)
        # linear block: x @ w[:, 1:1+d]^T (contraction on the feature axis)
        y_t = y_t + lax.dot_general(x, w[:, 1:1 + d], _CDIMS,
                                    preferred_element_type=jnp.float32)
        # quadratic block, grouped by leading index i: columns x_i * x_j, j >= i
        off = 1 + d
        for i in range(d):
            width = d - i
            quad_i = x[:, i:i + 1] * x[:, i:]                            # (B, d-i)
            y_t = y_t + lax.dot_general(quad_i, w[:, off:off + width], _CDIMS,
                                        preferred_element_type=jnp.float32)
            off += width
        # y_t == y_pred^T, shape (B, n), n on the lane axis (dense vregs)

        # column-oriented mean for centering (broadcasts against y_t rows)
        mu_col = jnp.sum(y_t, axis=1, keepdims=True) * inv_n            # (B, 1)
        diff = y_t - mu_col                                             # (B, n)
        cov = lax.dot_general(diff, diff, _CDIMS,
                              preferred_element_type=jnp.float32) * inv_nm1

        # add var to the diagonal without materializing eye
        cov_ref[s] = jnp.where(diag, cov + var, cov)

        # lane-dense (1, B) mean via a tiny ones-row contraction
        # (avoids a sublane->lane relayout of mu_col)
        mu_row = lax.dot_general(ones_row, y_t, _CDIMS,
                                 preferred_element_type=jnp.float32) * inv_n
        mu_ref[s] = mu_row


# ---------------------------------------------------------------------------
# Wrappers
# ---------------------------------------------------------------------------
def sparse_glm_gaussian_forward_batched(xs, w, var_scalar, *, s_block=None):
    """Batched forward.

    xs: (S, B, d) f32 -- S independent inputs of the module's forward
    w : (n, F)    f32 -- reparameterized weights (n samples over F features)
    var_scalar: ()  f32
    returns: (mu (S, B), cov (S, B, B))
    """
    xs = jnp.asarray(xs, jnp.float32)
    w = jnp.asarray(w, jnp.float32)
    S, B, d = xs.shape
    n, F = w.shape
    assert F == num_poly_features(d, degree=2), "weights do not match feature library"
    var = jnp.reshape(jnp.asarray(var_scalar, jnp.float32), (1,))

    # block of forwards per grid step: amortize per-step overhead but keep at
    # least two grid steps when S > 1 so the "parallel" axis can shard across
    # TensorCores (megacore on v7x).
    if s_block is None:
        sb = max(1, min(8, pl.cdiv(S, 2)))
    else:
        sb = max(1, min(int(s_block), S))
    n_blocks = pl.cdiv(S, sb)
    S_pad = n_blocks * sb
    if S_pad != S:
        xs = jnp.concatenate(
            [xs, jnp.zeros((S_pad - S, B, d), jnp.float32)], axis=0)

    mu3d, cov = pl.pallas_call(
        _glm_forward_kernel,
        grid=(n_blocks,),
        in_specs=[
            pl.BlockSpec((sb, B, d), lambda i: (i, 0, 0)),
            pl.BlockSpec((n, F), lambda i: (0, 0)),              # resident across grid
            pl.BlockSpec(memory_space=pltpu.MemorySpace.SMEM),   # scalar var in SMEM
        ],
        out_specs=(
            pl.BlockSpec((sb, 1, B), lambda i: (i, 0, 0)),
            pl.BlockSpec((sb, B, B), lambda i: (i, 0, 0)),
        ),
        out_shape=(
            jax.ShapeDtypeStruct((S_pad, 1, B), jnp.float32),
            jax.ShapeDtypeStruct((S_pad, B, B), jnp.float32),
        ),
        compiler_params=pltpu.CompilerParams(
            dimension_semantics=("parallel",),   # shards grid across TCs on v7x
        ),
    )(xs, w, var)
    return mu3d[:S, 0, :], cov[:S]


def sparse_glm_gaussian_forward(x, w, var_scalar):
    """Module-faithful single forward: x (B, d) -> (mu (B,), cov (B, B))."""
    mu, cov = sparse_glm_gaussian_forward_batched(x[None], w, var_scalar)
    return mu[0], cov[0]


# ---------------------------------------------------------------------------
# Pure-JAX reference (mirror of the torch forward) for verification
# ---------------------------------------------------------------------------
def polynomial_features(x, degree=2):
    """x: (B, d) -> (B, 1 + d + d(d+1)/2) for degree=2 (bias, linear, quadratic)."""
    B, d = x.shape
    feats = [jnp.ones((B, 1), x.dtype), x]
    if degree >= 2:
        cols = []
        for i in range(d):
            for j in range(i, d):
                cols.append(x[:, i] * x[:, j])
        feats.append(jnp.stack(cols, axis=1))
    return jnp.concatenate(feats, axis=1)


def reference_forward(x, w, var):
    phi = polynomial_features(x)
    n = w.shape[0]
    B = x.shape[0]
    y_pred = (phi @ w.T).T                    # (n, B)
    mu = y_pred.mean(0)                       # (B,)
    diff = y_pred - mu
    cov = diff.T @ diff / (n - 1) + var * jnp.eye(B, dtype=jnp.float32)
    return mu, cov


def softplus_np(x):
    return math.log1p(math.exp(x))


def inverse_softplus_np(x):
    return math.log(math.exp(x) - 1.0)


if __name__ == "__main__":
    key = jax.random.PRNGKey(0)
    kx, kw = jax.random.split(key)

    # S independent forwards, each with batch B, state dim d, n reparam samples
    S, B, d, n = 4, 8, 4, 256
    F = num_poly_features(d, degree=2)        # 15

    xs = jax.random.normal(kx, (S, B, d), dtype=jnp.float32)
    # TODO(synk): stand-in for SVIHalfCauchyPrior.get_reparam_weights(n)
    w = 0.1 * jax.random.normal(kw, (n, F), dtype=jnp.float32)

    noise = 1e-3
    invsoftplus_sigma = inverse_softplus_np(noise)                # Parameter init
    var = jnp.float32(softplus_np(invsoftplus_sigma) ** 2)        # get_natural_parameters()

    # Batched kernel call (auto S-blocking)
    mu, cov = sparse_glm_gaussian_forward_batched(xs, w, var)
    mu, cov = jax.block_until_ready((mu, cov))
    for s in range(S):
        mu_ref, cov_ref = reference_forward(xs[s], w, var)
        np.testing.assert_allclose(np.asarray(mu[s]), np.asarray(mu_ref),
                                   rtol=1e-5, atol=1e-6)
        np.testing.assert_allclose(np.asarray(cov[s]), np.asarray(cov_ref),
                                   rtol=1e-4, atol=1e-6)

    # Ragged S with explicit block size (exercises the padding / partial-block path)
    mu_r, cov_r = sparse_glm_gaussian_forward_batched(xs[:3], w, var, s_block=2)
    mu_r, cov_r = jax.block_until_ready((mu_r, cov_r))
    for s in range(3):
        mu_ref, cov_ref = reference_forward(xs[s], w, var)
        np.testing.assert_allclose(np.asarray(mu_r[s]), np.asarray(mu_ref),
                                   rtol=1e-5, atol=1e-6)
        np.testing.assert_allclose(np.asarray(cov_r[s]), np.asarray(cov_ref),
                                   rtol=1e-4, atol=1e-6)

    # Module-faithful single-x forward (edge case S=1 of the same kernel)
    mu1, cov1 = sparse_glm_gaussian_forward(xs[0], w, var)
    mu1, cov1 = jax.block_until_ready((mu1, cov1))
    mu_ref0, cov_ref0 = reference_forward(xs[0], w, var)
    np.testing.assert_allclose(np.asarray(mu1), np.asarray(mu_ref0),
                               rtol=1e-5, atol=1e-6)
    np.testing.assert_allclose(np.asarray(cov1), np.asarray(cov_ref0),
                               rtol=1e-4, atol=1e-6)

    print("KERNEL_OK")
</pallas_src>

<mosaic_0001>
module attributes {stable_mosaic.version = 11 : i64} {
  func.func @_glm_forward_kernel(%arg0: i32, %arg1: memref<2x8x4xf32, #tpu.memory_space<vmem>>, %arg2: memref<256x15xf32, #tpu.memory_space<vmem>>, %arg3: memref<1xf32, #tpu.memory_space<smem>>, %arg4: memref<2x1x8xf32, #tpu.memory_space<vmem>>, %arg5: memref<2x8x8xf32, #tpu.memory_space<vmem>>) attributes {dimension_semantics = [#tpu.dimension_semantics<parallel>], iteration_bounds = array<i64: 2>, scalar_prefetch = 0 : i64, scratch_operands = 0 : i64, tpu.core_type = #tpu.core_type<tc>, window_params = [{transform_indices = @transform_0, window_bounds = array<i64: 2, 8, 4>}, {pipeline_mode = #tpu.pipeline_mode<synchronous>, transform_indices = @transform_1, window_bounds = array<i64: 256, 15>}, {transform_indices = @transform_2, window_bounds = array<i64: 1>}, {transform_indices = @transform_3, window_bounds = array<i64: 2, 1, 8>}, {transform_indices = @transform_4, window_bounds = array<i64: 2, 8, 8>}]} {
    %c0 = arith.constant 0 : index
    %c0_0 = arith.constant 0 : index
    %0 = vector.load %arg2[%c0, %c0_0] : memref<256x15xf32, #tpu.memory_space<vmem>>, vector<256x15xf32>
    %c0_1 = arith.constant 0 : index
    %1 = memref.load %arg3[%c0_1] : memref<1xf32, #tpu.memory_space<smem>>
    %cst = arith.constant 1.000000e+00 : f32
    %2 = vector.broadcast %cst : f32 to vector<8x1xf32>
    %cst_2 = arith.constant 1.000000e+00 : f32
    %3 = vector.broadcast %cst_2 : f32 to vector<1x256xf32>
    %4 = tpu.iota {dimensions = array<i32: 0>} : vector<8x8xi32>
    %5 = tpu.iota {dimensions = array<i32: 1>} : vector<8x8xi32>
    %6 = arith.cmpi eq, %4, %5 : vector<8x8xi32>
    %c0_3 = arith.constant 0 : index
    %c0_4 = arith.constant 0 : index
    %c0_5 = arith.constant 0 : index
    %7 = vector.load %arg1[%c0_3, %c0_4, %c0_5] : memref<2x8x4xf32, #tpu.memory_space<vmem>>, vector<1x8x4xf32>
    %8 = vector.shape_cast %7 : vector<1x8x4xf32> to vector<8x4xf32>
    %9 = vector.extract_strided_slice %0 {offsets = [0, 0], sizes = [256, 1], strides = [1, 1]} : vector<256x15xf32> to vector<256x1xf32>
    %cst_6 = arith.constant dense<0.000000e+00> : vector<8x256xf32>
    %10 = tpu.matmul %2, %9, %cst_6 {dimension_numbers = #tpu.dot_dimension_numbers<[1], [1], [0], [0], [0, 0, 1, 0], [], []>} : vector<8x1xf32>, vector<256x1xf32>, vector<8x256xf32> -> vector<8x256xf32>
    %11 = vector.extract_strided_slice %0 {offsets = [0, 1], sizes = [256, 4], strides = [1, 1]} : vector<256x15xf32> to vector<256x4xf32>
    %cst_7 = arith.constant dense<0.000000e+00> : vector<8x256xf32>
    %12 = tpu.matmul %8, %11, %cst_7 {dimension_numbers = #tpu.dot_dimension_numbers<[1], [1], [0], [0], [0, 0, 1, 0], [], []>} : vector<8x4xf32>, vector<256x4xf32>, vector<8x256xf32> -> vector<8x256xf32>
    %13 = arith.addf %10, %12 : vector<8x256xf32>
    %14 = vector.extract_strided_slice %8 {offsets = [0, 0], sizes = [8, 1], strides = [1, 1]} : vector<8x4xf32> to vector<8x1xf32>
    %15 = vector.broadcast %14 : vector<8x1xf32> to vector<8x4xf32>
    %16 = arith.mulf %15, %8 : vector<8x4xf32>
    %17 = vector.extract_strided_slice %0 {offsets = [0, 5], sizes = [256, 4], strides = [1, 1]} : vector<256x15xf32> to vector<256x4xf32>
    %cst_8 = arith.constant dense<0.000000e+00> : vector<8x256xf32>
    %18 = tpu.matmul %16, %17, %cst_8 {dimension_numbers = #tpu.dot_dimension_numbers<[1], [1], [0], [0], [0, 0, 1, 0], [], []>} : vector<8x4xf32>, vector<256x4xf32>, vector<8x256xf32> -> vector<8x256xf32>
    %19 = arith.addf %13, %18 : vector<8x256xf32>
    %20 = vector.extract_strided_slice %8 {offsets = [0, 1], sizes = [8, 1], strides = [1, 1]} : vector<8x4xf32> to vector<8x1xf32>
    %21 = vector.extract_strided_slice %8 {offsets = [0, 1], sizes = [8, 3], strides = [1, 1]} : vector<8x4xf32> to vector<8x3xf32>
    %22 = vector.broadcast %20 : vector<8x1xf32> to vector<8x3xf32>
    %23 = arith.mulf %22, %21 : vector<8x3xf32>
    %24 = vector.extract_strided_slice %0 {offsets = [0, 9], sizes = [256, 3], strides = [1, 1]} : vector<256x15xf32> to vector<256x3xf32>
    %cst_9 = arith.constant dense<0.000000e+00> : vector<8x256xf32>
    %25 = tpu.matmul %23, %24, %cst_9 {dimension_numbers = #tpu.dot_dimension_numbers<[1], [1], [0], [0], [0, 0, 1, 0], [], []>} : vector<8x3xf32>, vector<256x3xf32>, vector<8x256xf32> -> vector<8x256xf32>
    %26 = arith.addf %19, %25 : vector<8x256xf32>
    %27 = vector.extract_strided_slice %8 {offsets = [0, 2], sizes = [8, 1], strides = [1, 1]} : vector<8x4xf32> to vector<8x1xf32>
    %28 = vector.extract_strided_slice %8 {offsets = [0, 2], sizes = [8, 2], strides = [1, 1]} : vector<8x4xf32> to vector<8x2xf32>
    %29 = vector.broadcast %27 : vector<8x1xf32> to vector<8x2xf32>
    %30 = arith.mulf %29, %28 : vector<8x2xf32>
    %31 = vector.extract_strided_slice %0 {offsets = [0, 12], sizes = [256, 2], strides = [1, 1]} : vector<256x15xf32> to vector<256x2xf32>
    %cst_10 = arith.constant dense<0.000000e+00> : vector<8x256xf32>
    %32 = tpu.matmul %30, %31, %cst_10 {dimension_numbers = #tpu.dot_dimension_numbers<[1], [1], [0], [0], [0, 0, 1, 0], [], []>} : vector<8x2xf32>, vector<256x2xf32>, vector<8x256xf32> -> vector<8x256xf32>
    %33 = arith.addf %26, %32 : vector<8x256xf32>
    %34 = vector.extract_strided_slice %8 {offsets = [0, 3], sizes = [8, 1], strides = [1, 1]} : vector<8x4xf32> to vector<8x1xf32>
    %35 = vector.extract_strided_slice %8 {offsets = [0, 3], sizes = [8, 1], strides = [1, 1]} : vector<8x4xf32> to vector<8x1xf32>
    %36 = arith.mulf %34, %35 : vector<8x1xf32>
    %37 = vector.extract_strided_slice %0 {offsets = [0, 14], sizes = [256, 1], strides = [1, 1]} : vector<256x15xf32> to vector<256x1xf32>
    %cst_11 = arith.constant dense<0.000000e+00> : vector<8x256xf32>
    %38 = tpu.matmul %36, %37, %cst_11 {dimension_numbers = #tpu.dot_dimension_numbers<[1], [1], [0], [0], [0, 0, 1, 0], [], []>} : vector<8x1xf32>, vector<256x1xf32>, vector<8x256xf32> -> vector<8x256xf32>
    %39 = arith.addf %33, %38 : vector<8x256xf32>
    %cst_12 = arith.constant dense<0.000000e+00> : vector<8xf32>
    %40 = vector.multi_reduction <add>, %39, %cst_12 [1] : vector<8x256xf32> to vector<8xf32>
    %41 = vector.shape_cast %40 : vector<8xf32> to vector<8x1xf32>
    %cst_13 = arith.constant 3.906250e-03 : f32
    %42 = vector.broadcast %cst_13 : f32 to vector<8x1xf32>
    %43 = arith.mulf %41, %42 : vector<8x1xf32>
    %44 = vector.broadcast %43 : vector<8x1xf32> to vector<8x256xf32>
    %45 = arith.subf %39, %44 : vector<8x256xf32>
    %cst_14 = arith.constant dense<0.000000e+00> : vector<8x8xf32>
    %46 = tpu.matmul %45, %45, %cst_14 {dimension_numbers = #tpu.dot_dimension_numbers<[1], [1], [0], [0], [0, 0, 1, 0], [], []>} : vector<8x256xf32>, vector<8x256xf32>, vector<8x8xf32> -> vector<8x8xf32>
    %cst_15 = arith.constant 0.00392156886 : f32
    %47 = vector.broadcast %cst_15 : f32 to vector<8x8xf32>
    %48 = arith.mulf %46, %47 : vector<8x8xf32>
    %49 = vector.broadcast %1 : f32 to vector<8x8xf32>
    %50 = arith.addf %48, %49 : vector<8x8xf32>
    %51 = arith.select %6, %50, %48 : vector<8x8xi1>, vector<8x8xf32>
    %c0_16 = arith.constant 0 : index
    %c0_17 = arith.constant 0 : index
    %c0_18 = arith.constant 0 : index
    %52 = vector.load %arg5[%c0_16, %c0_17, %c0_18] : memref<2x8x8xf32, #tpu.memory_space<vmem>>, vector<1x8x8xf32>
    %53 = vector.shape_cast %52 : vector<1x8x8xf32> to vector<8x8xf32>
    %54 = vector.shape_cast %51 : vector<8x8xf32> to vector<1x8x8xf32>
    tpu.vector_store %arg5[%c0_16, %c0_17, %c0_18], %54 {strides = array<i32>} : memref<2x8x8xf32, #tpu.memory_space<vmem>>, vector<1x8x8xf32>,
    %cst_19 = arith.constant dense<0.000000e+00> : vector<1x8xf32>
    %55 = tpu.matmul %3, %39, %cst_19 {dimension_numbers = #tpu.dot_dimension_numbers<[1], [1], [0], [0], [0, 0, 1, 0], [], []>} : vector<1x256xf32>, vector<8x256xf32>, vector<1x8xf32> -> vector<1x8xf32>
    %cst_20 = arith.constant 3.906250e-03 : f32
    %56 = vector.broadcast %cst_20 : f32 to vector<1x8xf32>
    %57 = arith.mulf %55, %56 : vector<1x8xf32>
    %c0_21 = arith.constant 0 : index
    %c0_22 = arith.constant 0 : index
    %c0_23 = arith.constant 0 : index
    %58 = vector.load %arg4[%c0_21, %c0_22, %c0_23] : memref<2x1x8xf32, #tpu.memory_space<vmem>>, vector<1x1x8xf32>
    %59 = vector.shape_cast %58 : vector<1x1x8xf32> to vector<1x8xf32>
    %60 = vector.shape_cast %57 : vector<1x8xf32> to vector<1x1x8xf32>
    tpu.vector_store %arg4[%c0_21, %c0_22, %c0_23], %60 {strides = array<i32>} : memref<2x1x8xf32, #tpu.memory_space<vmem>>, vector<1x1x8xf32>,
    %c1 = arith.constant 1 : index
    %c0_24 = arith.constant 0 : index
    %c0_25 = arith.constant 0 : index
    %61 = vector.load %arg1[%c1, %c0_24, %c0_25] : memref<2x8x4xf32, #tpu.memory_space<vmem>>, vector<1x8x4xf32>
    %62 = vector.shape_cast %61 : vector<1x8x4xf32> to vector<8x4xf32>
    %63 = vector.extract_strided_slice %0 {offsets = [0, 0], sizes = [256, 1], strides = [1, 1]} : vector<256x15xf32> to vector<256x1xf32>
    %cst_26 = arith.constant dense<0.000000e+00> : vector<8x256xf32>
    %64 = tpu.matmul %2, %63, %cst_26 {dimension_numbers = #tpu.dot_dimension_numbers<[1], [1], [0], [0], [0, 0, 1, 0], [], []>} : vector<8x1xf32>, vector<256x1xf32>, vector<8x256xf32> -> vector<8x256xf32>
    %65 = vector.extract_strided_slice %0 {offsets = [0, 1], sizes = [256, 4], strides = [1, 1]} : vector<256x15xf32> to vector<256x4xf32>
    %cst_27 = arith.constant dense<0.000000e+00> : vector<8x256xf32>
    %66 = tpu.matmul %62, %65, %cst_27 {dimension_numbers = #tpu.dot_dimension_numbers<[1], [1], [0], [0], [0, 0, 1, 0], [], []>} : vector<8x4xf32>, vector<256x4xf32>, vector<8x256xf32> -> vector<8x256xf32>
    %67 = arith.addf %64, %66 : vector<8x256xf32>
    %68 = vector.extract_strided_slice %62 {offsets = [0, 0], sizes = [8, 1], strides = [1, 1]} : vector<8x4xf32> to vector<8x1xf32>
    %69 = vector.broadcast %68 : vector<8x1xf32> to vector<8x4xf32>
    %70 = arith.mulf %69, %62 : vector<8x4xf32>
    %71 = vector.extract_strided_slice %0 {offsets = [0, 5], sizes = [256, 4], strides = [1, 1]} : vector<256x15xf32> to vector<256x4xf32>
    %cst_28 = arith.constant dense<0.000000e+00> : vector<8x256xf32>
    %72 = tpu.matmul %70, %71, %cst_28 {dimension_numbers = #tpu.dot_dimension_numbers<[1], [1], [0], [0], [0, 0, 1, 0], [], []>} : vector<8x4xf32>, vector<256x4xf32>, vector<8x256xf32> -> vector<8x256xf32>
    %73 = arith.addf %67, %72 : vector<8x256xf32>
    %74 = vector.extract_strided_slice %62 {offsets = [0, 1], sizes = [8, 1], strides = [1, 1]} : vector<8x4xf32> to vector<8x1xf32>
    %75 = vector.extract_strided_slice %62 {offsets = [0, 1], sizes = [8, 3], strides = [1, 1]} : vector<8x4xf32> to vector<8x3xf32>
    %76 = vector.broadcast %74 : vector<8x1xf32> to vector<8x3xf32>
    %77 = arith.mulf %76, %75 : vector<8x3xf32>
    %78 = vector.extract_strided_slice %0 {offsets = [0, 9], sizes = [256, 3], strides = [1, 1]} : vector<256x15xf32> to vector<256x3xf32>
    %cst_29 = arith.constant dense<0.000000e+00> : vector<8x256xf32>
    %79 = tpu.matmul %77, %78, %cst_29 {dimension_numbers = #tpu.dot_dimension_numbers<[1], [1], [0], [0], [0, 0, 1, 0], [], []>} : vector<8x3xf32>, vector<256x3xf32>, vector<8x256xf32> -> vector<8x256xf32>
    %80 = arith.addf %73, %79 : vector<8x256xf32>
    %81 = vector.extract_strided_slice %62 {offsets = [0, 2], sizes = [8, 1], strides = [1, 1]} : vector<8x4xf32> to vector<8x1xf32>
    %82 = vector.extract_strided_slice %62 {offsets = [0, 2], sizes = [8, 2], strides = [1, 1]} : vector<8x4xf32> to vector<8x2xf32>
    %83 = vector.broadcast %81 : vector<8x1xf32> to vector<8x2xf32>
    %84 = arith.mulf %83, %82 : vector<8x2xf32>
    %85 = vector.extract_strided_slice %0 {offsets = [0, 12], sizes = [256, 2], strides = [1, 1]} : vector<256x15xf32> to vector<256x2xf32>
    %cst_30 = arith.constant dense<0.000000e+00> : vector<8x256xf32>
    %86 = tpu.matmul %84, %85, %cst_30 {dimension_numbers = #tpu.dot_dimension_numbers<[1], [1], [0], [0], [0, 0, 1, 0], [], []>} : vector<8x2xf32>, vector<256x2xf32>, vector<8x256xf32> -> vector<8x256xf32>
    %87 = arith.addf %80, %86 : vector<8x256xf32>
    %88 = vector.extract_strided_slice %62 {offsets = [0, 3], sizes = [8, 1], strides = [1, 1]} : vector<8x4xf32> to vector<8x1xf32>
    %89 = vector.extract_strided_slice %62 {offsets = [0, 3], sizes = [8, 1], strides = [1, 1]} : vector<8x4xf32> to vector<8x1xf32>
    %90 = arith.mulf %88, %89 : vector<8x1xf32>
    %91 = vector.extract_strided_slice %0 {offsets = [0, 14], sizes = [256, 1], strides = [1, 1]} : vector<256x15xf32> to vector<256x1xf32>
    %cst_31 = arith.constant dense<0.000000e+00> : vector<8x256xf32>
    %92 = tpu.matmul %90, %91, %cst_31 {dimension_numbers = #tpu.dot_dimension_numbers<[1], [1], [0], [0], [0, 0, 1, 0], [], []>} : vector<8x1xf32>, vector<256x1xf32>, vector<8x256xf32> -> vector<8x256xf32>
    %93 = arith.addf %87, %92 : vector<8x256xf32>
    %cst_32 = arith.constant dense<0.000000e+00> : vector<8xf32>
    %94 = vector.multi_reduction <add>, %93, %cst_32 [1] : vector<8x256xf32> to vector<8xf32>
    %95 = vector.shape_cast %94 : vector<8xf32> to vector<8x1xf32>
    %cst_33 = arith.constant 3.906250e-03 : f32
    %96 = vector.broadcast %cst_33 : f32 to vector<8x1xf32>
    %97 = arith.mulf %95, %96 : vector<8x1xf32>
    %98 = vector.broadcast %97 : vector<8x1xf32> to vector<8x256xf32>
    %99 = arith.subf %93, %98 : vector<8x256xf32>
    %cst_34 = arith.constant dense<0.000000e+00> : vector<8x8xf32>
    %100 = tpu.matmul %99, %99, %cst_34 {dimension_numbers = #tpu.dot_dimension_numbers<[1], [1], [0], [0], [0, 0, 1, 0], [], []>} : vector<8x256xf32>, vector<8x256xf32>, vector<8x8xf32> -> vector<8x8xf32>
    %cst_35 = arith.constant 0.00392156886 : f32
    %101 = vector.broadcast %cst_35 : f32 to vector<8x8xf32>
    %102 = arith.mulf %100, %101 : vector<8x8xf32>
    %103 = vector.broadcast %1 : f32 to vector<8x8xf32>
    %104 = arith.addf %102, %103 : vector<8x8xf32>
    %105 = arith.select %6, %104, %102 : vector<8x8xi1>, vector<8x8xf32>
    %c1_36 = arith.constant 1 : index
    %c0_37 = arith.constant 0 : index
    %c0_38 = arith.constant 0 : index
    %106 = vector.load %arg5[%c1_36, %c0_37, %c0_38] : memref<2x8x8xf32, #tpu.memory_space<vmem>>, vector<1x8x8xf32>
    %107 = vector.shape_cast %106 : vector<1x8x8xf32> to vector<8x8xf32>
    %108 = vector.shape_cast %105 : vector<8x8xf32> to vector<1x8x8xf32>
    tpu.vector_store %arg5[%c1_36, %c0_37, %c0_38], %108 {strides = array<i32>} : memref<2x8x8xf32, #tpu.memory_space<vmem>>, vector<1x8x8xf32>,
    %cst_39 = arith.constant dense<0.000000e+00> : vector<1x8xf32>
    %109 = tpu.matmul %3, %93, %cst_39 {dimension_numbers = #tpu.dot_dimension_numbers<[1], [1], [0], [0], [0, 0, 1, 0], [], []>} : vector<1x256xf32>, vector<8x256xf32>, vector<1x8xf32> -> vector<1x8xf32>
    %cst_40 = arith.constant 3.906250e-03 : f32
    %110 = vector.broadcast %cst_40 : f32 to vector<1x8xf32>
    %111 = arith.mulf %109, %110 : vector<1x8xf32>
    %c1_41 = arith.constant 1 : index
    %c0_42 = arith.constant 0 : index
    %c0_43 = arith.constant 0 : index
    %112 = vector.load %arg4[%c1_41, %c0_42, %c0_43] : memref<2x1x8xf32, #tpu.memory_space<vmem>>, vector<1x1x8xf32>
    %113 = vector.shape_cast %112 : vector<1x1x8xf32> to vector<1x8xf32>
    %114 = vector.shape_cast %111 : vector<1x8xf32> to vector<1x1x8xf32>
    tpu.vector_store %arg4[%c1_41, %c0_42, %c0_43], %114 {strides = array<i32>} : memref<2x1x8xf32, #tpu.memory_space<vmem>>, vector<1x1x8xf32>,
    return
  }
  func.func @transform_0(%arg0: i32) -> (i32, i32, i32) {
    %c0_i32 = arith.constant 0 : i32
    %c0_i32_0 = arith.constant 0 : i32
    %c0_i32_1 = arith.constant 0 : i32
    return %arg0, %c0_i32, %c0_i32_0 : i32, i32, i32
  }
  func.func @transform_1(%arg0: i32) -> (i32, i32) {
    %c0_i32 = arith.constant 0 : i32
    %c0_i32_0 = arith.constant 0 : i32
    %c0_i32_1 = arith.constant 0 : i32
    return %c0_i32, %c0_i32_0 : i32, i32
  }
  func.func @transform_2(%arg0: i32) -> i32 {
    %c0_i32 = arith.constant 0 : i32
    %c0_i32_0 = arith.constant 0 : i32
    return %c0_i32 : i32
  }
  func.func @transform_3(%arg0: i32) -> (i32, i32, i32) {
    %c0_i32 = arith.constant 0 : i32
    %c0_i32_0 = arith.constant 0 : i32
    %c0_i32_1 = arith.constant 0 : i32
    return %arg0, %c0_i32, %c0_i32_0 : i32, i32, i32
  }
  func.func @transform_4(%arg0: i32) -> (i32, i32, i32) {
    %c0_i32 = arith.constant 0 : i32
    %c0_i32_0 = arith.constant 0 : i32
    %c0_i32_1 = arith.constant 0 : i32
    return %arg0, %c0_i32, %c0_i32_0 : i32, i32, i32
  }
}

</mosaic_0001>

<llo_original>
// kernel: tpu_custom_call.1
$region0: #{tpu_custom_call.1}
  #allocation0 [shape = 'u32[]', space=smem, size = 0x4, offset = 0x4, fixed_abs, tag = 'smem constant byte address 0x4 - core index']
  #allocation1 [shape = 'u32[144,128]{1,0:T(1,128)}', space=vmem, size = 0x12000, scoped, tag = 'internal scratch']
  #allocation2 [shape = 'f32[1]{0:T(128)S(6)}', space=smem, size = 0x200, scoped, tag = 'scoped memory for tpu_custom_call.1']
  %s0 = inlined_call_operand.vmem [shape: f32[4,8,4], index: 0, kind: input, shape index: {}]
  %s1 = inlined_call_operand.vmem [shape: f32[256,15], index: 1, kind: input, shape index: {}]
  %s2 = inlined_call_operand.<no memory space> [shape: f32[1], index: 2, kind: input, shape index: {}]
  %s3 = inlined_call_operand.hbm [shape: f32[4,1,8], index: 3, kind: output, shape index: {0}]
  %s4 = inlined_call_operand.hbm [shape: f32[4,8,8], index: 4, kind: output, shape index: {1}]
  %5 = xla_tuple %s3, %s4
  %s6 = sld [smem:[#allocation0]]
  $region53: #{tpu_custom_call.1} parent=0
    _
  %s8 = ssub.s32 1, %s6
  %s9 = scalar_select 0, %s8, %s6
  %10 = sst [smem:[#allocation2]] %s2
  $region1: #{tpu_custom_call.1} parent=0
    #allocation3 [shape = 'u8[2048]{0}', space=vmem, size = 0x800, scoped, tag = 'output window, operand 0']
    #allocation4 [shape = 's32[2]{0}', space=sflag, size = 0x8, scoped, tag = 'scoped memory for tpu_custom_call.1']
    #allocation5 [shape = 'u8[16384]{0}', space=vmem, size = 0x4000, scoped, tag = 'output window, operand 1']
    #allocation6 [shape = 's32[2]{0}', space=sflag, size = 0x8, scoped, tag = 'scoped memory for tpu_custom_call.1']
    %11 = vsyncpa [#allocation4], 0
    %s12 = scalar_lea.sflag [#allocation4], 1
    %13 = vsyncpa %s12, 0
    %14 = vsyncpa [#allocation6], 0
    %s15 = scalar_lea.sflag [#allocation6], 1
    %16 = vsyncpa %s15, 0
    loop: start=0, step=1, limit=4
    $region2: #{tpu_custom_call.1} parent=1 // loop_pre_header
      _
    $region3: #{tpu_custom_call.1} parent=1 // loop_header
      %s18 = sphi 0, %s22
      %p19 = scmp.ge.s32.totalorder %s18, 4
      %s28 = sphi 0, %s30
      %s31 = sphi 0, %s28
      %s32 = sphi 0, %s31
      %s48 = sphi 0, %s32
      %s52 = sphi 0, %s52
      %s54 = sphi 0, %s52
      %s55 = sphi 0, %s54
      %s69 = sphi 0, %s55
      %s73 = sphi 0, %s73
      %s75 = sphi 0, %s73
      %s76 = sphi 0, %s75
      %s90 = sphi 0, %s76
      %s96 = sphi 0, %s98
      %s99 = sphi 0, %s96
      %s100 = sphi 0, %s99
      %s116 = sphi 0, %s100
      %s122 = sphi 0, %s124
      %s125 = sphi 0, %s122
      %s126 = sphi 0, %s125
      %s142 = sphi 0, %s126
    $region4: #{tpu_custom_call.1} parent=1 // loop_header_branch
      %21 = sbr.rel (%p19) target = $region8
    $region5: #{tpu_custom_call.1} parent=1 // loop_body
      %s23 = ssub.s32 %s18, 1
      %s24 = ssub.s32 %s18, 2
      %s25 = sadd.s32 %s18, 1
      %s26 = ssub.s32 %s18, %s25
      %p27 = scmp.eq.s32.totalorder %s26, 0
      %s29 = sadd.s32 %s28, 1
      %s30 = scalar_select %p27, %s28, %s29
      %p33 = pneg %p27
      %p34 = scmp.eq.s32.totalorder %s18, 1
      %p35 = por %p33, %p34
      %p36 = scmp.ne.s32.totalorder %s28, %s31
      %p37 = scmp.eq.s32.totalorder %s18, 0
      %p38 = por %p36, %p37
      %p39 = scmp.ne.s32.totalorder %s28, %s31
      %p40 = scmp.eq.s32.totalorder %s23, 1
      %p41 = por %p39, %p40
      %p42 = scmp.ne.s32.totalorder %s31, %s32
      %p43 = scmp.eq.s32.totalorder %s23, 0
      %p44 = por %p42, %p43
      %p45 = scmp.ne.s32.totalorder %s31, %s32
      %p46 = scmp.eq.s32.totalorder %s24, 1
      %p47 = por %p45, %p46
      %p49 = scmp.ne.s32.totalorder %s32, %s48
      %p50 = scmp.eq.s32.totalorder %s24, 0
      %p51 = por %p49, %p50
      %s53 = sadd.s32 %s52, 1
      %p56 = scmp.eq.s32.totalorder %s18, 1
      %p57 = scmp.ne.s32.totalorder %s52, %s54
      %p58 = scmp.eq.s32.totalorder %s18, 0
      %p59 = por %p57, %p58
      %p60 = scmp.ne.s32.totalorder %s52, %s54
      %p61 = scmp.eq.s32.totalorder %s23, 1
      %p62 = por %p60, %p61
      %p63 = scmp.ne.s32.totalorder %s54, %s55
      %p64 = scmp.eq.s32.totalorder %s23, 0
      %p65 = por %p63, %p64
      %p66 = scmp.ne.s32.totalorder %s54, %s55
      %p67 = scmp.eq.s32.totalorder %s24, 1
      %p68 = por %p66, %p67
      %p70 = scmp.ne.s32.totalorder %s55, %s69
      %p71 = scmp.eq.s32.totalorder %s24, 0
      %p72 = por %p70, %p71
      %s74 = sadd.s32 %s73, 1
      %p77 = scmp.eq.s32.totalorder %s18, 1
      %p78 = scmp.ne.s32.totalorder %s73, %s75
      %p79 = scmp.eq.s32.totalorder %s18, 0
      %p80 = por %p78, %p79
      %p81 = scmp.ne.s32.totalorder %s73, %s75
      %p82 = scmp.eq.s32.totalorder %s23, 1
      %p83 = por %p81, %p82
      %p84 = scmp.ne.s32.totalorder %s75, %s76
      %p85 = scmp.eq.s32.totalorder %s23, 0
      %p86 = por %p84, %p85
      %p87 = scmp.ne.s32.totalorder %s75, %s76
      %p88 = scmp.eq.s32.totalorder %s24, 1
      %p89 = por %p87, %p88
      %p91 = scmp.ne.s32.totalorder %s76, %s90
      %p92 = scmp.eq.s32.totalorder %s24, 0
      %p93 = por %p91, %p92
      %s94 = ssub.s32 %s18, %s25
      %p95 = scmp.eq.s32.totalorder %s94, 0
      %s97 = sadd.s32 %s96, 1
      %s98 = scalar_select %p95, %s96, %s97
      %p101 = pneg %p95
      %p102 = scmp.eq.s32.totalorder %s18, 1
      %p103 = por %p101, %p102
      %p104 = scmp.ne.s32.totalorder %s96, %s99
      %p105 = scmp.eq.s32.totalorder %s18, 0
      %p106 = por %p104, %p105
      %p107 = scmp.ne.s32.totalorder %s96, %s99
      %p108 = scmp.eq.s32.totalorder %s23, 1
      %p109 = por %p107, %p108
      %p110 = scmp.ne.s32.totalorder %s99, %s100
      %p111 = scmp.eq.s32.totalorder %s23, 0
      %p112 = por %p110, %p111
      %p113 = scmp.ne.s32.totalorder %s99, %s100
      %p114 = scmp.eq.s32.totalorder %s24, 1
      %p115 = por %p113, %p114
      %p117 = scmp.ne.s32.totalorder %s100, %s116
      %p118 = scmp.eq.s32.totalorder %s24, 0
      %p119 = por %p117, %p118
      %s120 = ssub.s32 %s18, %s25
      %p121 = scmp.eq.s32.totalorder %s120, 0
      %s123 = sadd.s32 %s122, 1
      %s124 = scalar_select %p121, %s122, %s123
      %p127 = pneg %p121
      %p128 = scmp.eq.s32.totalorder %s18, 1
      %p129 = por %p127, %p128
      %p130 = scmp.ne.s32.totalorder %s122, %s125
      %p131 = scmp.eq.s32.totalorder %s18, 0
      %p132 = por %p130, %p131
      %p133 = scmp.ne.s32.totalorder %s122, %s125
      %p134 = scmp.eq.s32.totalorder %s23, 1
      %p135 = por %p133, %p134
      %p136 = scmp.ne.s32.totalorder %s125, %s126
      %p137 = scmp.eq.s32.totalorder %s23, 0
      %p138 = por %p136, %p137
      %p139 = scmp.ne.s32.totalorder %s125, %s126
      %p140 = scmp.eq.s32.totalorder %s24, 1
      %p141 = por %p139, %p140
      %p143 = scmp.ne.s32.totalorder %s126, %s142
      %p144 = scmp.eq.s32.totalorder %s24, 0
      %p145 = por %p143, %p144
      %p146 = scmp.le.s32.totalorder 1, %s18
      %p147 = scmp.lt.s32.totalorder %s18, 3
      %p148 = pnand %p146, %p147
      %p149 = pneg %p148
      // Predicated region
      $region9: #{tpu_custom_call.1} parent=5 // pred_check
        _
      $region10: #{tpu_custom_call.1} parent=5 // pred_check_branch
        %151 = sbr.rel (%p148) target = $region12
      $region11: #{tpu_custom_call.1} parent=5 // pred_region
        %s152 = ssub.s32 %s18, 1
        // Predicated region
        $region13: #{tpu_custom_call.1} parent=11 // pred_check
          %p153 = pneg %p65
        $region14: #{tpu_custom_call.1} parent=11 // pred_check_branch
          %155 = sbr.rel (%p153) target = $region16
        $region15: #{tpu_custom_call.1} parent=11 // pred_region
          _
        $region16: #{tpu_custom_call.1} parent=11 // pred_fallthru
          _
        // Predicated region
        $region17: #{tpu_custom_call.1} parent=11 // pred_check
          %p156 = pneg %p86
        $region18: #{tpu_custom_call.1} parent=11 // pred_check_branch
          %158 = sbr.rel (%p156) target = $region20
        $region19: #{tpu_custom_call.1} parent=11 // pred_region
          _
        $region20: #{tpu_custom_call.1} parent=11 // pred_fallthru
          _
      $region12: #{tpu_custom_call.1} parent=5 // pred_fallthru
        _
      %p159 = scmp.lt.s32.totalorder %s18, 2
      // Predicated region
      $region21: #{tpu_custom_call.1} parent=5 // pred_check
        %p160 = pneg %p159
      $region22: #{tpu_custom_call.1} parent=5 // pred_check_branch
        %162 = sbr.rel (%p160) target = $region24
      $region23: #{tpu_custom_call.1} parent=5 // pred_region
        // Predicated region
        $region25: #{tpu_custom_call.1} parent=23 // pred_check
          %p163 = pneg %p38
        $region26: #{tpu_custom_call.1} parent=23 // pred_check_branch
          %165 = sbr.rel (%p163) target = $region28
        $region27: #{tpu_custom_call.1} parent=23 // pred_region
          %s166 = smul.u32 2, %s18
          %p167 = scmp.lt.s32.totalorder %s166, 3
          %s168 = scalar_select %p167, %s166, 3
          %s169 = smul.addr %s168, 8
          %s170 = scalar_lea.vmem %s0, %s169
          %s171 = smul.u32 2, %s18
        $region28: #{tpu_custom_call.1} parent=23 // pred_fallthru
          _
      $region24: #{tpu_custom_call.1} parent=5 // pred_fallthru
        _
      %p172 = scmp.le.s32.totalorder 1, %s18
      %p173 = scmp.lt.s32.totalorder %s18, 3
      %p174 = pnand %p172, %p173
      %p175 = pneg %p174
      // Predicated region
      $region29: #{tpu_custom_call.1} parent=5 // pred_check
        _
      $region30: #{tpu_custom_call.1} parent=5 // pred_check_branch
        %177 = sbr.rel (%p174) target = $region32
      $region31: #{tpu_custom_call.1} parent=5 // pred_region
        %s178 = ssub.s32 %s18, 1
        %s179 = smul.u32 2, %s23
        %p180 = scmp.lt.s32.totalorder %s179, 3
        %s181 = scalar_select %p180, %s179, 3
        %s182 = smul.addr %s181, 8
        %s183 = scalar_lea.vmem %s0, %s182
        %p184 = pneg %p44
        %p185 = pneg %p41
        %p186 = pneg %p65
        %p187 = pneg %p62
        %p188 = pneg %p86
        %p189 = pneg %p83
        %p190 = pneg %p112
        %p191 = pneg %p109
        %s192 = sand.u32 %s99, 1
        %s193 = scalar_lea.sflag [#allocation4], %s192
        %s194 = sand.u32 %s99, 1
        %s195 = smul.addr %s194, 2
        %s196 = scalar_lea.vmem [#allocation3], %s195
        %p197 = pneg %p138
        %p198 = pneg %p135
        %s199 = sand.u32 %s125, 1
        %s200 = scalar_lea.sflag [#allocation6], %s199
        %s201 = sand.u32 %s125, 1
        %s202 = smul.addr %s201, 16
        %s203 = scalar_lea.vmem [#allocation5], %s202
        %s204 = smul.u32 2, %s23
        %p205 = scmp.lt.s32.totalorder %s204, 3
        %s206 = scalar_select %p205, %s204, 3
        %s207 = smul.addr %s206, 8
        %s208 = scalar_lea.vmem %s0, %s207
        %s209 = smul.u32 2, %s23
        %s210 = smul.u32 2, %s23
        %s211 = smul.u32 2, %s23
        %v212 = vld [vmem:[%s1] sm:$0xff]
        %v213 = vld [vmem:[%s1 + $0x8] sm:$0xff]
        %v214 = vld [vmem:[%s1 + $0x10] sm:$0xff]
        %v215 = vld [vmem:[%s1 + $0x18] sm:$0xff]
        %v216 = vld [vmem:[%s1 + $0x20] sm:$0xff]
        %v217 = vld [vmem:[%s1 + $0x28] sm:$0xff]
        %v218 = vld [vmem:[%s1 + $0x30] sm:$0xff]
        %v219 = vld [vmem:[%s1 + $0x38] sm:$0xff]
        %v220 = vld [vmem:[%s1 + $0x40] sm:$0xff]
        %v221 = vld [vmem:[%s1 + $0x48] sm:$0xff]
        %v222 = vld [vmem:[%s1 + $0x50] sm:$0xff]
        %v223 = vld [vmem:[%s1 + $0x58] sm:$0xff]
        %v224 = vld [vmem:[%s1 + $0x60] sm:$0xff]
        %v225 = vld [vmem:[%s1 + $0x68] sm:$0xff]
        %v226 = vld [vmem:[%s1 + $0x70] sm:$0xff]
        %v227 = vld [vmem:[%s1 + $0x78] sm:$0xff]
        %v228 = vld [vmem:[%s1 + $0x80] sm:$0xff]
        %v229 = vld [vmem:[%s1 + $0x88] sm:$0xff]
        %v230 = vld [vmem:[%s1 + $0x90] sm:$0xff]
        %v231 = vld [vmem:[%s1 + $0x98] sm:$0xff]
        %v232 = vld [vmem:[%s1 + $0xa0] sm:$0xff]
        %v233 = vld [vmem:[%s1 + $0xa8] sm:$0xff]
        %v234 = vld [vmem:[%s1 + $0xb0] sm:$0xff]
        %v235 = vld [vmem:[%s1 + $0xb8] sm:$0xff]
        %v236 = vld [vmem:[%s1 + $0xc0] sm:$0xff]
        %v237 = vld [vmem:[%s1 + $0xc8] sm:$0xff]
        %v238 = vld [vmem:[%s1 + $0xd0] sm:$0xff]
        %v239 = vld [vmem:[%s1 + $0xd8] sm:$0xff]
        %v240 = vld [vmem:[%s1 + $0xe0] sm:$0xff]
        %v241 = vld [vmem:[%s1 + $0xe8] sm:$0xff]
        %v242 = vld [vmem:[%s1 + $0xf0] sm:$0xff]
        %v243 = vld [vmem:[%s1 + $0xf8] sm:$0xff]
        %s244 = sld [smem:[#allocation2]]
        %v245 = vlaneseq
        %v246 = vshrl.u32 %v245, 7
        %v247 = vlaneseq
        %v248 = vand.u32 %v247, 127
        %vm249 = vcmp.eq.s32.totalorder %v246, %v248
        %v250 = vld [vmem:[%s208] sm:$0xff]
        %283 = vrot.lane.b32.xlu0 %v212, 127
        %v284 = vpop.permute.xlu0 %283
        %285 = vrot.lane.b32.xlu0 %v213, 127
        %v286 = vpop.permute.xlu0 %285
        %287 = vrot.lane.b32.xlu0 %v214, 127
        %v288 = vpop.permute.xlu0 %287
        %289 = vrot.lane.b32.xlu0 %v215, 127
        %v290 = vpop.permute.xlu0 %289
        %291 = vrot.lane.b32.xlu0 %v216, 127
        %v292 = vpop.permute.xlu0 %291
        %293 = vrot.lane.b32.xlu0 %v217, 127
        %v294 = vpop.permute.xlu0 %293
        %295 = vrot.lane.b32.xlu0 %v218, 127
        %v296 = vpop.permute.xlu0 %295
        %297 = vrot.lane.b32.xlu0 %v219, 127
        %v298 = vpop.permute.xlu0 %297
        %299 = vrot.lane.b32.xlu0 %v220, 127
        %v300 = vpop.permute.xlu0 %299
        %301 = vrot.lane.b32.xlu0 %v221, 127
        %v302 = vpop.permute.xlu0 %301
        %303 = vrot.lane.b32.xlu0 %v222, 127
        %v304 = vpop.permute.xlu0 %303
        %305 = vrot.lane.b32.xlu0 %v223, 127
        %v306 = vpop.permute.xlu0 %305
        %307 = vrot.lane.b32.xlu0 %v224, 127
        %v308 = vpop.permute.xlu0 %307
        %309 = vrot.lane.b32.xlu0 %v225, 127
        %v310 = vpop.permute.xlu0 %309
        %311 = vrot.lane.b32.xlu0 %v226, 127
        %v312 = vpop.permute.xlu0 %311
        %313 = vrot.lane.b32.xlu0 %v227, 127
        %v314 = vpop.permute.xlu0 %313
        %315 = vrot.lane.b32.xlu0 %v228, 127
        %v316 = vpop.permute.xlu0 %315
        %317 = vrot.lane.b32.xlu0 %v229, 127
        %v318 = vpop.permute.xlu0 %317
        %319 = vrot.lane.b32.xlu0 %v230, 127
        %v320 = vpop.permute.xlu0 %319
        %321 = vrot.lane.b32.xlu0 %v231, 127
        %v322 = vpop.permute.xlu0 %321
        %323 = vrot.lane.b32.xlu0 %v232, 127
        %v324 = vpop.permute.xlu0 %323
        %325 = vrot.lane.b32.xlu0 %v233, 127
        %v326 = vpop.permute.xlu0 %325
        %327 = vrot.lane.b32.xlu0 %v234, 127
        %v328 = vpop.permute.xlu0 %327
        %329 = vrot.lane.b32.xlu0 %v235, 127
        %v330 = vpop.permute.xlu0 %329
        %331 = vrot.lane.b32.xlu0 %v236, 127
        %v332 = vpop.permute.xlu0 %331
        %333 = vrot.lane.b32.xlu0 %v237, 127
        %v334 = vpop.permute.xlu0 %333
        %335 = vrot.lane.b32.xlu0 %v238, 127
        %v336 = vpop.permute.xlu0 %335
        %337 = vrot.lane.b32.xlu0 %v239, 127
        %v338 = vpop.permute.xlu0 %337
        %339 = vrot.lane.b32.xlu0 %v240, 127
        %v340 = vpop.permute.xlu0 %339
        %341 = vrot.lane.b32.xlu0 %v241, 127
        %v342 = vpop.permute.xlu0 %341
        %343 = vrot.lane.b32.xlu0 %v242, 127
        %v344 = vpop.permute.xlu0 %343
        %345 = vrot.lane.b32.xlu0 %v243, 127
        %v346 = vpop.permute.xlu0 %345
        %vm347 = vcmask 31744
        %v349 = vsel %vm347, %v250, 0
        %v351 = vsel %vm347, %v284, 0
        %v353 = vsel %vm347, %v286, 0
        %v355 = vsel %vm347, %v288, 0
        %v357 = vsel %vm347, %v290, 0
        %v359 = vsel %vm347, %v292, 0
        %v361 = vsel %vm347, %v294, 0
        %v363 = vsel %vm347, %v296, 0
        %v365 = vsel %vm347, %v298, 0
        %v367 = vsel %vm347, %v300, 0
        %v369 = vsel %vm347, %v302, 0
        %v371 = vsel %vm347, %v304, 0
        %v373 = vsel %vm347, %v306, 0
        %v375 = vsel %vm347, %v308, 0
        %v377 = vsel %vm347, %v310, 0
        %v379 = vsel %vm347, %v312, 0
        %v381 = vsel %vm347, %v314, 0
        %v383 = vsel %vm347, %v316, 0
        %v385 = vsel %vm347, %v318, 0
        %v387 = vsel %vm347, %v320, 0
        %v389 = vsel %vm347, %v322, 0
        %v391 = vsel %vm347, %v324, 0
        %v393 = vsel %vm347, %v326, 0
        %v395 = vsel %vm347, %v328, 0
        %v397 = vsel %vm347, %v330, 0
        %v399 = vsel %vm347, %v332, 0
        %v401 = vsel %vm347, %v334, 0
        %v403 = vsel %vm347, %v336, 0
        %v405 = vsel %vm347, %v338, 0
        %v407 = vsel %vm347, %v340, 0
        %v409 = vsel %vm347, %v342, 0
        %v411 = vsel %vm347, %v344, 0
        %v413 = vsel %vm347, %v346, 0
        %415 = vmatprep.subr.mxu0 0.0
        %416 = vmatpush1.xpose.msra.mxu0 %v351
        %417 = vmatprep.subr.mxu0 0.0
        %418 = vmatpush1.xpose.msra.mxu0 %v353
        %419 = vmatprep.subr.mxu0 0.0
        %420 = vmatpush1.xpose.msra.mxu0 %v355
        %421 = vmatprep.subr.mxu0 0.0
        %422 = vmatpush1.xpose.msra.mxu0 %v357
        %423 = vmatprep.subr.mxu0 0.0
        %424 = vmatpush1.xpose.msra.mxu0 %v359
        %425 = vmatprep.subr.mxu0 0.0
        %426 = vmatpush1.xpose.msra.mxu0 %v361
        %427 = vmatprep.subr.mxu0 0.0
        %428 = vmatpush1.xpose.msra.mxu0 %v363
        %429 = vmatprep.subr.mxu0 0.0
        %430 = vmatpush1.xpose.msra.mxu0 %v365
        %431 = vmatprep.subr.mxu0 0.0
        %432 = vmatpush1.xpose.msra.mxu0 %v367
        %433 = vmatprep.subr.mxu0 0.0
        %434 = vmatpush1.xpose.msra.mxu0 %v369
        %435 = vmatprep.subr.mxu0 0.0
        %436 = vmatpush1.xpose.msra.mxu0 %v371
        %437 = vmatprep.subr.mxu0 0.0
        %438 = vmatpush1.xpose.msra.mxu0 %v373
        %439 = vmatprep.subr.mxu0 0.0
        %440 = vmatpush1.xpose.msra.mxu0 %v375
        %441 = vmatprep.subr.mxu0 0.0
        %442 = vmatpush1.xpose.msra.mxu0 %v377
        %443 = vmatprep.subr.mxu0 0.0
        %444 = vmatpush1.xpose.msra.mxu0 %v379
        %445 = vmatprep.subr.mxu0 0.0
        %446 = vmatpush1.xpose.msra.mxu0 %v381
        %447 = vmatprep.subr.mxu0 0.0
        %448 = vmatpush1.xpose.msra.mxu0 %v383
        %449 = vmatprep.subr.mxu0 0.0
        %450 = vmatpush1.xpose.msra.mxu0 %v385
        %451 = vmatprep.subr.mxu0 0.0
        %452 = vmatpush1.xpose.msra.mxu0 %v387
        %453 = vmatprep.subr.mxu0 0.0
        %454 = vmatpush1.xpose.msra.mxu0 %v389
        %455 = vmatprep.subr.mxu0 0.0
        %456 = vmatpush1.xpose.msra.mxu0 %v391
        %457 = vmatprep.subr.mxu0 0.0
        %458 = vmatpush1.xpose.msra.mxu0 %v393
        %459 = vmatprep.subr.mxu0 0.0
        %460 = vmatpush1.xpose.msra.mxu0 %v395
        %461 = vmatprep.subr.mxu0 0.0
        %462 = vmatpush1.xpose.msra.mxu0 %v397
        %463 = vmatprep.subr.mxu0 0.0
        %464 = vmatpush1.xpose.msra.mxu0 %v399
        %465 = vmatprep.subr.mxu0 0.0
        %466 = vmatpush1.xpose.msra.mxu0 %v401
        %467 = vmatprep.subr.mxu0 0.0
        %468 = vmatpush1.xpose.msra.mxu0 %v403
        %469 = vmatprep.subr.mxu0 0.0
        %470 = vmatpush1.xpose.msra.mxu0 %v405
        %471 = vmatprep.subr.mxu0 0.0
        %472 = vmatpush1.xpose.msra.mxu0 %v407
        %473 = vmatprep.subr.mxu0 0.0
        %474 = vmatpush1.xpose.msra.mxu0 %v409
        %475 = vmatprep.subr.mxu0 0.0
        %476 = vmatpush1.xpose.msra.mxu0 %v411
        %477 = vmatprep.subr.mxu0 0.0
        %478 = vmatpush1.xpose.msra.mxu0 %v413
        %479 = vmatprep.mubr.f32.mxu0 0.0
        %480 = vmatmul.mubr.f32.gmra.mrb[0].mxu0 %v349
        %v481 = vpop.f32.mrb[0].mxu0
        %v482 = vadd.f32 0.0, %v481
        %v483 = vpop.f32.mrb[0].mxu0
        %v484 = vadd.f32 0.0, %v483
        %485 = vdwg.mxu0
        %vm486 = vcmask 7168
        %v488 = vsel %vm486, 1.0, 0
        %v490 = vsel %vm486, %v212, 0
        %v492 = vsel %vm486, %v213, 0
        %v494 = vsel %vm486, %v214, 0
        %v496 = vsel %vm486, %v215, 0
        %v498 = vsel %vm486, %v216, 0
        %v500 = vsel %vm486, %v217, 0
        %v502 = vsel %vm486, %v218, 0
        %v504 = vsel %vm486, %v219, 0
        %v506 = vsel %vm486, %v220, 0
        %v508 = vsel %vm486, %v221, 0
        %v510 = vsel %vm486, %v222, 0
        %v512 = vsel %vm486, %v223, 0
        %v514 = vsel %vm486, %v224, 0
        %v516 = vsel %vm486, %v225, 0
        %v518 = vsel %vm486, %v226, 0
        %v520 = vsel %vm486, %v227, 0
        %v522 = vsel %vm486, %v228, 0
        %v524 = vsel %vm486, %v229, 0
        %v526 = vsel %vm486, %v230, 0
        %v528 = vsel %vm486, %v231, 0
        %v530 = vsel %vm486, %v232, 0
        %v532 = vsel %vm486, %v233, 0
        %v534 = vsel %vm486, %v234, 0
        %v536 = vsel %vm486, %v235, 0
        %v538 = vsel %vm486, %v236, 0
        %v540 = vsel %vm486, %v237, 0
        %v542 = vsel %vm486, %v238, 0
        %v544 = vsel %vm486, %v239, 0
        %v546 = vsel %vm486, %v240, 0
        %v548 = vsel %vm486, %v241, 0
        %v550 = vsel %vm486, %v242, 0
        %v552 = vsel %vm486, %v243, 0
        %554 = vmatprep.subr.mxu0 0.0
        %555 = vmatpush1.xpose.msra.mxu0 %v490
        %556 = vmatprep.subr.mxu0 0.0
        %557 = vmatpush1.xpose.msra.mxu0 %v492
        %558 = vmatprep.subr.mxu0 0.0
        %559 = vmatpush1.xpose.msra.mxu0 %v494
        %560 = vmatprep.subr.mxu0 0.0
        %561 = vmatpush1.xpose.msra.mxu0 %v496
        %562 = vmatprep.subr.mxu0 0.0
        %563 = vmatpush1.xpose.msra.mxu0 %v498
        %564 = vmatprep.subr.mxu0 0.0
        %565 = vmatpush1.xpose.msra.mxu0 %v500
        %566 = vmatprep.subr.mxu0 0.0
        %567 = vmatpush1.xpose.msra.mxu0 %v502
        %568 = vmatprep.subr.mxu0 0.0
        %569 = vmatpush1.xpose.msra.mxu0 %v504
        %570 = vmatprep.subr.mxu0 0.0
        %571 = vmatpush1.xpose.msra.mxu0 %v506
        %572 = vmatprep.subr.mxu0 0.0
        %573 = vmatpush1.xpose.msra.mxu0 %v508
        %574 = vmatprep.subr.mxu0 0.0
        %575 = vmatpush1.xpose.msra.mxu0 %v510
        %576 = vmatprep.subr.mxu0 0.0
        %577 = vmatpush1.xpose.msra.mxu0 %v512
        %578 = vmatprep.subr.mxu0 0.0
        %579 = vmatpush1.xpose.msra.mxu0 %v514
        %580 = vmatprep.subr.mxu0 0.0
        %581 = vmatpush1.xpose.msra.mxu0 %v516
        %582 = vmatprep.subr.mxu0 0.0
        %583 = vmatpush1.xpose.msra.mxu0 %v518
        %584 = vmatprep.subr.mxu0 0.0
        %585 = vmatpush1.xpose.msra.mxu0 %v520
        %586 = vmatprep.subr.mxu0 0.0
        %587 = vmatpush1.xpose.msra.mxu0 %v522
        %588 = vmatprep.subr.mxu0 0.0
        %589 = vmatpush1.xpose.msra.mxu0 %v524
        %590 = vmatprep.subr.mxu0 0.0
        %591 = vmatpush1.xpose.msra.mxu0 %v526
        %592 = vmatprep.subr.mxu0 0.0
        %593 = vmatpush1.xpose.msra.mxu0 %v528
        %594 = vmatprep.subr.mxu0 0.0
        %595 = vmatpush1.xpose.msra.mxu0 %v530
        %596 = vmatprep.subr.mxu0 0.0
        %597 = vmatpush1.xpose.msra.mxu0 %v532
        %598 = vmatprep.subr.mxu0 0.0
        %599 = vmatpush1.xpose.msra.mxu0 %v534
        %600 = vmatprep.subr.mxu0 0.0
        %601 = vmatpush1.xpose.msra.mxu0 %v536
        %602 = vmatprep.subr.mxu0 0.0
        %603 = vmatpush1.xpose.msra.mxu0 %v538
        %604 = vmatprep.subr.mxu0 0.0
        %605 = vmatpush1.xpose.msra.mxu0 %v540
        %606 = vmatprep.subr.mxu0 0.0
        %607 = vmatpush1.xpose.msra.mxu0 %v542
        %608 = vmatprep.subr.mxu0 0.0
        %609 = vmatpush1.xpose.msra.mxu0 %v544
        %610 = vmatprep.subr.mxu0 0.0
        %611 = vmatpush1.xpose.msra.mxu0 %v546
        %612 = vmatprep.subr.mxu0 0.0
        %613 = vmatpush1.xpose.msra.mxu0 %v548
        %614 = vmatprep.subr.mxu0 0.0
        %615 = vmatpush1.xpose.msra.mxu0 %v550
        %616 = vmatprep.subr.mxu0 0.0
        %617 = vmatpush1.xpose.msra.mxu0 %v552
        %618 = vmatprep.mubr.f32.mxu0 0.0
        %619 = vmatmul.mubr.f32.gmra.mrb[0].mxu0 %v488
        %v620 = vpop.f32.mrb[0].mxu0
        %v621 = vadd.f32 %v482, %v620
        %v622 = vpop.f32.mrb[0].mxu0
        %v623 = vadd.f32 %v484, %v622
        %624 = vdwg.mxu0
        %625 = vset.pattern.permute.xlu0 0
        %626 = vperm.xlu0 %625, %v250
        %v627 = vpop.permute.xlu0 %626
        %v629 = vmul.f32 %v627, %v250
        %630 = vrot.lane.b32.xlu0 %v212, 123
        %v631 = vpop.permute.xlu0 %630
        %632 = vrot.lane.b32.xlu0 %v213, 123
        %v633 = vpop.permute.xlu0 %632
        %634 = vrot.lane.b32.xlu0 %v214, 123
        %v635 = vpop.permute.xlu0 %634
        %636 = vrot.lane.b32.xlu0 %v215, 123
        %v637 = vpop.permute.xlu0 %636
        %638 = vrot.lane.b32.xlu0 %v216, 123
        %v639 = vpop.permute.xlu0 %638
        %640 = vrot.lane.b32.xlu0 %v217, 123
        %v641 = vpop.permute.xlu0 %640
        %642 = vrot.lane.b32.xlu0 %v218, 123
        %v643 = vpop.permute.xlu0 %642
        %644 = vrot.lane.b32.xlu0 %v219, 123
        %v645 = vpop.permute.xlu0 %644
        %646 = vrot.lane.b32.xlu0 %v220, 123
        %v647 = vpop.permute.xlu0 %646
        %648 = vrot.lane.b32.xlu0 %v221, 123
        %v649 = vpop.permute.xlu0 %648
        %650 = vrot.lane.b32.xlu0 %v222, 123
        %v651 = vpop.permute.xlu0 %650
        %652 = vrot.lane.b32.xlu0 %v223, 123
        %v653 = vpop.permute.xlu0 %652
        %654 = vrot.lane.b32.xlu0 %v224, 123
        %v655 = vpop.permute.xlu0 %654
        %656 = vrot.lane.b32.xlu0 %v225, 123
        %v657 = vpop.permute.xlu0 %656
        %658 = vrot.lane.b32.xlu0 %v226, 123
        %v659 = vpop.permute.xlu0 %658
        %660 = vrot.lane.b32.xlu0 %v227, 123
        %v661 = vpop.permute.xlu0 %660
        %662 = vrot.lane.b32.xlu0 %v228, 123
        %v663 = vpop.permute.xlu0 %662
        %664 = vrot.lane.b32.xlu0 %v229, 123
        %v665 = vpop.permute.xlu0 %664
        %666 = vrot.lane.b32.xlu0 %v230, 123
        %v667 = vpop.permute.xlu0 %666
        %668 = vrot.lane.b32.xlu0 %v231, 123
        %v669 = vpop.permute.xlu0 %668
        %670 = vrot.lane.b32.xlu0 %v232, 123
        %v671 = vpop.permute.xlu0 %670
        %672 = vrot.lane.b32.xlu0 %v233, 123
        %v673 = vpop.permute.xlu0 %672
        %674 = vrot.lane.b32.xlu0 %v234, 123
        %v675 = vpop.permute.xlu0 %674
        %676 = vrot.lane.b32.xlu0 %v235, 123
        %v677 = vpop.permute.xlu0 %676
        %678 = vrot.lane.b32.xlu0 %v236, 123
        %v679 = vpop.permute.xlu0 %678
        %680 = vrot.lane.b32.xlu0 %v237, 123
        %v681 = vpop.permute.xlu0 %680
        %682 = vrot.lane.b32.xlu0 %v238, 123
        %v683 = vpop.permute.xlu0 %682
        %684 = vrot.lane.b32.xlu0 %v239, 123
        %v685 = vpop.permute.xlu0 %684
        %686 = vrot.lane.b32.xlu0 %v240, 123
        %v687 = vpop.permute.xlu0 %686
        %688 = vrot.lane.b32.xlu0 %v241, 123
        %v689 = vpop.permute.xlu0 %688
        %690 = vrot.lane.b32.xlu0 %v242, 123
        %v691 = vpop.permute.xlu0 %690
        %692 = vrot.lane.b32.xlu0 %v243, 123
        %v693 = vpop.permute.xlu0 %692
        %v695 = vsel %vm347, %v629, 0
        %v697 = vsel %vm347, %v631, 0
        %v699 = vsel %vm347, %v633, 0
        %v701 = vsel %vm347, %v635, 0
        %v703 = vsel %vm347, %v637, 0
        %v705 = vsel %vm347, %v639, 0
        %v707 = vsel %vm347, %v641, 0
        %v709 = vsel %vm347, %v643, 0
        %v711 = vsel %vm347, %v645, 0
        %v713 = vsel %vm347, %v647, 0
        %v715 = vsel %vm347, %v649, 0
        %v717 = vsel %vm347, %v651, 0
        %v719 = vsel %vm347, %v653, 0
        %v721 = vsel %vm347, %v655, 0
        %v723 = vsel %vm347, %v657, 0
        %v725 = vsel %vm347, %v659, 0
        %v727 = vsel %vm347, %v661, 0
        %v729 = vsel %vm347, %v663, 0
        %v731 = vsel %vm347, %v665, 0
        %v733 = vsel %vm347, %v667, 0
        %v735 = vsel %vm347, %v669, 0
        %v737 = vsel %vm347, %v671, 0
        %v739 = vsel %vm347, %v673, 0
        %v741 = vsel %vm347, %v675, 0
        %v743 = vsel %vm347, %v677, 0
        %v745 = vsel %vm347, %v679, 0
        %v747 = vsel %vm347, %v681, 0
        %v749 = vsel %vm347, %v683, 0
        %v751 = vsel %vm347, %v685, 0
        %v753 = vsel %vm347, %v687, 0
        %v755 = vsel %vm347, %v689, 0
        %v757 = vsel %vm347, %v691, 0
        %v759 = vsel %vm347, %v693, 0
        %761 = vmatprep.subr.mxu0 0.0
        %762 = vmatpush1.xpose.msra.mxu0 %v697
        %763 = vmatprep.subr.mxu0 0.0
        %764 = vmatpush1.xpose.msra.mxu0 %v699
        %765 = vmatprep.subr.mxu0 0.0
        %766 = vmatpush1.xpose.msra.mxu0 %v701
        %767 = vmatprep.subr.mxu0 0.0
        %768 = vmatpush1.xpose.msra.mxu0 %v703
        %769 = vmatprep.subr.mxu0 0.0
        %770 = vmatpush1.xpose.msra.mxu0 %v705
        %771 = vmatprep.subr.mxu0 0.0
        %772 = vmatpush1.xpose.msra.mxu0 %v707
        %773 = vmatprep.subr.mxu0 0.0
        %774 = vmatpush1.xpose.msra.mxu0 %v709
        %775 = vmatprep.subr.mxu0 0.0
        %776 = vmatpush1.xpose.msra.mxu0 %v711
        %777 = vmatprep.subr.mxu0 0.0
        %778 = vmatpush1.xpose.msra.mxu0 %v713
        %779 = vmatprep.subr.mxu0 0.0
        %780 = vmatpush1.xpose.msra.mxu0 %v715
        %781 = vmatprep.subr.mxu0 0.0
        %782 = vmatpush1.xpose.msra.mxu0 %v717
        %783 = vmatprep.subr.mxu0 0.0
        %784 = vmatpush1.xpose.msra.mxu0 %v719
        %785 = vmatprep.subr.mxu0 0.0
        %786 = vmatpush1.xpose.msra.mxu0 %v721
        %787 = vmatprep.subr.mxu0 0.0
        %788 = vmatpush1.xpose.msra.mxu0 %v723
        %789 = vmatprep.subr.mxu0 0.0
        %790 = vmatpush1.xpose.msra.mxu0 %v725
        %791 = vmatprep.subr.mxu0 0.0
        %792 = vmatpush1.xpose.msra.mxu0 %v727
        %793 = vmatprep.subr.mxu0 0.0
        %794 = vmatpush1.xpose.msra.mxu0 %v729
        %795 = vmatprep.subr.mxu0 0.0
        %796 = vmatpush1.xpose.msra.mxu0 %v731
        %797 = vmatprep.subr.mxu0 0.0
        %798 = vmatpush1.xpose.msra.mxu0 %v733
        %799 = vmatprep.subr.mxu0 0.0
        %800 = vmatpush1.xpose.msra.mxu0 %v735
        %801 = vmatprep.subr.mxu0 0.0
        %802 = vmatpush1.xpose.msra.mxu0 %v737
        %803 = vmatprep.subr.mxu0 0.0
        %804 = vmatpush1.xpose.msra.mxu0 %v739
        %805 = vmatprep.subr.mxu0 0.0
        %806 = vmatpush1.xpose.msra.mxu0 %v741
        %807 = vmatprep.subr.mxu0 0.0
        %808 = vmatpush1.xpose.msra.mxu0 %v743
        %809 = vmatprep.subr.mxu0 0.0
        %810 = vmatpush1.xpose.msra.mxu0 %v745
        %811 = vmatprep.subr.mxu0 0.0
        %812 = vmatpush1.xpose.msra.mxu0 %v747
        %813 = vmatprep.subr.mxu0 0.0
        %814 = vmatpush1.xpose.msra.mxu0 %v749
        %815 = vmatprep.subr.mxu0 0.0
        %816 = vmatpush1.xpose.msra.mxu0 %v751
        %817 = vmatprep.subr.mxu0 0.0
        %818 = vmatpush1.xpose.msra.mxu0 %v753
        %819 = vmatprep.subr.mxu0 0.0
        %820 = vmatpush1.xpose.msra.mxu0 %v755
        %821 = vmatprep.subr.mxu0 0.0
        %822 = vmatpush1.xpose.msra.mxu0 %v757
        %823 = vmatprep.subr.mxu0 0.0
        %824 = vmatpush1.xpose.msra.mxu0 %v759
        %825 = vmatprep.mubr.f32.mxu0 0.0
        %826 = vmatmul.mubr.f32.gmra.mrb[0].mxu0 %v695
        %v827 = vpop.f32.mrb[0].mxu0
        %v828 = vadd.f32 0.0, %v827
        %v829 = vpop.f32.mrb[0].mxu0
        %v830 = vadd.f32 0.0, %v829
        %831 = vdwg.mxu0
        %v832 = vadd.f32 %v621, %v828
        %v833 = vadd.f32 %v623, %v830
        %834 = vset.pattern.permute.xlu0 1
        %835 = vperm.xlu0 %834, %v250
        %v836 = vpop.permute.xlu0 %835
        %v838 = vmul.f32 %v836, %v250
        %840 = vrot.lane.b32.xlu0 %v838, 127
        %v841 = vpop.permute.xlu0 %840
        %842 = vrot.lane.b32.xlu0 %v212, 119
        %v843 = vpop.permute.xlu0 %842
        %844 = vrot.lane.b32.xlu0 %v213, 119
        %v845 = vpop.permute.xlu0 %844
        %846 = vrot.lane.b32.xlu0 %v214, 119
        %v847 = vpop.permute.xlu0 %846
        %848 = vrot.lane.b32.xlu0 %v215, 119
        %v849 = vpop.permute.xlu0 %848
        %850 = vrot.lane.b32.xlu0 %v216, 119
        %v851 = vpop.permute.xlu0 %850
        %852 = vrot.lane.b32.xlu0 %v217, 119
        %v853 = vpop.permute.xlu0 %852
        %854 = vrot.lane.b32.xlu0 %v218, 119
        %v855 = vpop.permute.xlu0 %854
        %856 = vrot.lane.b32.xlu0 %v219, 119
        %v857 = vpop.permute.xlu0 %856
        %858 = vrot.lane.b32.xlu0 %v220, 119
        %v859 = vpop.permute.xlu0 %858
        %860 = vrot.lane.b32.xlu0 %v221, 119
        %v861 = vpop.permute.xlu0 %860
        %862 = vrot.lane.b32.xlu0 %v222, 119
        %v863 = vpop.permute.xlu0 %862
        %864 = vrot.lane.b32.xlu0 %v223, 119
        %v865 = vpop.permute.xlu0 %864
        %866 = vrot.lane.b32.xlu0 %v224, 119
        %v867 = vpop.permute.xlu0 %866
        %868 = vrot.lane.b32.xlu0 %v225, 119
        %v869 = vpop.permute.xlu0 %868
        %870 = vrot.lane.b32.xlu0 %v226, 119
        %v871 = vpop.permute.xlu0 %870
        %872 = vrot.lane.b32.xlu0 %v227, 119
        %v873 = vpop.permute.xlu0 %872
        %874 = vrot.lane.b32.xlu0 %v228, 119
        %v875 = vpop.permute.xlu0 %874
        %876 = vrot.lane.b32.xlu0 %v229, 119
        %v877 = vpop.permute.xlu0 %876
        %878 = vrot.lane.b32.xlu0 %v230, 119
        %v879 = vpop.permute.xlu0 %878
        %880 = vrot.lane.b32.xlu0 %v231, 119
        %v881 = vpop.permute.xlu0 %880
        %882 = vrot.lane.b32.xlu0 %v232, 119
        %v883 = vpop.permute.xlu0 %882
        %884 = vrot.lane.b32.xlu0 %v233, 119
        %v885 = vpop.permute.xlu0 %884
        %886 = vrot.lane.b32.xlu0 %v234, 119
        %v887 = vpop.permute.xlu0 %886
        %888 = vrot.lane.b32.xlu0 %v235, 119
        %v889 = vpop.permute.xlu0 %888
        %890 = vrot.lane.b32.xlu0 %v236, 119
        %v891 = vpop.permute.xlu0 %890
        %892 = vrot.lane.b32.xlu0 %v237, 119
        %v893 = vpop.permute.xlu0 %892
        %894 = vrot.lane.b32.xlu0 %v238, 119
        %v895 = vpop.permute.xlu0 %894
        %896 = vrot.lane.b32.xlu0 %v239, 119
        %v897 = vpop.permute.xlu0 %896
        %898 = vrot.lane.b32.xlu0 %v240, 119
        %v899 = vpop.permute.xlu0 %898
        %900 = vrot.lane.b32.xlu0 %v241, 119
        %v901 = vpop.permute.xlu0 %900
        %902 = vrot.lane.b32.xlu0 %v242, 119
        %v903 = vpop.permute.xlu0 %902
        %904 = vrot.lane.b32.xlu0 %v243, 119
        %v905 = vpop.permute.xlu0 %904
        %vm906 = vcmask 23552
        %v907 = vsel %vm906, %v841, 0
        %v909 = vsel %vm906, %v843, 0
        %v911 = vsel %vm906, %v845, 0
        %v913 = vsel %vm906, %v847, 0
        %v915 = vsel %vm906, %v849, 0
        %v917 = vsel %vm906, %v851, 0
        %v919 = vsel %vm906, %v853, 0
        %v921 = vsel %vm906, %v855, 0
        %v923 = vsel %vm906, %v857, 0
        %v925 = vsel %vm906, %v859, 0
        %v927 = vsel %vm906, %v861, 0
        %v929 = vsel %vm906, %v863, 0
        %v931 = vsel %vm906, %v865, 0
        %v933 = vsel %vm906, %v867, 0
        %v935 = vsel %vm906, %v869, 0
        %v937 = vsel %vm906, %v871, 0
        %v939 = vsel %vm906, %v873, 0
        %v941 = vsel %vm906, %v875, 0
        %v943 = vsel %vm906, %v877, 0
        %v945 = vsel %vm906, %v879, 0
        %v947 = vsel %vm906, %v881, 0
        %v949 = vsel %vm906, %v883, 0
        %v951 = vsel %vm906, %v885, 0
        %v953 = vsel %vm906, %v887, 0
        %v955 = vsel %vm906, %v889, 0
        %v957 = vsel %vm906, %v891, 0
        %v959 = vsel %vm906, %v893, 0
        %v961 = vsel %vm906, %v895, 0
        %v963 = vsel %vm906, %v897, 0
        %v965 = vsel %vm906, %v899, 0
        %v967 = vsel %vm906, %v901, 0
        %v969 = vsel %vm906, %v903, 0
        %v971 = vsel %vm906, %v905, 0
        %973 = vmatprep.subr.mxu0 0.0
        %974 = vmatpush1.xpose.msra.mxu0 %v909
        %975 = vmatprep.subr.mxu0 0.0
        %976 = vmatpush1.xpose.msra.mxu0 %v911
        %977 = vmatprep.subr.mxu0 0.0
        %978 = vmatpush1.xpose.msra.mxu0 %v913
        %979 = vmatprep.subr.mxu0 0.0
        %980 = vmatpush1.xpose.msra.mxu0 %v915
        %981 = vmatprep.subr.mxu0 0.0
        %982 = vmatpush1.xpose.msra.mxu0 %v917
        %983 = vmatprep.subr.mxu0 0.0
        %984 = vmatpush1.xpose.msra.mxu0 %v919
        %985 = vmatprep.subr.mxu0 0.0
        %986 = vmatpush1.xpose.msra.mxu0 %v921
        %987 = vmatprep.subr.mxu0 0.0
        %988 = vmatpush1.xpose.msra.mxu0 %v923
        %989 = vmatprep.subr.mxu0 0.0
        %990 = vmatpush1.xpose.msra.mxu0 %v925
        %991 = vmatprep.subr.mxu0 0.0
        %992 = vmatpush1.xpose.msra.mxu0 %v927
        %993 = vmatprep.subr.mxu0 0.0
        %994 = vmatpush1.xpose.msra.mxu0 %v929
        %995 = vmatprep.subr.mxu0 0.0
        %996 = vmatpush1.xpose.msra.mxu0 %v931
        %997 = vmatprep.subr.mxu0 0.0
        %998 = vmatpush1.xpose.msra.mxu0 %v933
        %999 = vmatprep.subr.mxu0 0.0
        %1000 = vmatpush1.xpose.msra.mxu0 %v935
        %1001 = vmatprep.subr.mxu0 0.0
        %1002 = vmatpush1.xpose.msra.mxu0 %v937
        %1003 = vmatprep.subr.mxu0 0.0
        %1004 = vmatpush1.xpose.msra.mxu0 %v939
        %1005 = vmatprep.subr.mxu0 0.0
        %1006 = vmatpush1.xpose.msra.mxu0 %v941
        %1007 = vmatprep.subr.mxu0 0.0
        %1008 = vmatpush1.xpose.msra.mxu0 %v943
        %1009 = vmatprep.subr.mxu0 0.0
        %1010 = vmatpush1.xpose.msra.mxu0 %v945
        %1011 = vmatprep.subr.mxu0 0.0
        %1012 = vmatpush1.xpose.msra.mxu0 %v947
        %1013 = vmatprep.subr.mxu0 0.0
        %1014 = vmatpush1.xpose.msra.mxu0 %v949
        %1015 = vmatprep.subr.mxu0 0.0
        %1016 = vmatpush1.xpose.msra.mxu0 %v951
        %1017 = vmatprep.subr.mxu0 0.0
        %1018 = vmatpush1.xpose.msra.mxu0 %v953
        %1019 = vmatprep.subr.mxu0 0.0
        %1020 = vmatpush1.xpose.msra.mxu0 %v955
        %1021 = vmatprep.subr.mxu0 0.0
        %1022 = vmatpush1.xpose.msra.mxu0 %v957
        %1023 = vmatprep.subr.mxu0 0.0
        %1024 = vmatpush1.xpose.msra.mxu0 %v959
        %1025 = vmatprep.subr.mxu0 0.0
        %1026 = vmatpush1.xpose.msra.mxu0 %v961
        %1027 = vmatprep.subr.mxu0 0.0
        %1028 = vmatpush1.xpose.msra.mxu0 %v963
        %1029 = vmatprep.subr.mxu0 0.0
        %1030 = vmatpush1.xpose.msra.mxu0 %v965
        %1031 = vmatprep.subr.mxu0 0.0
        %1032 = vmatpush1.xpose.msra.mxu0 %v967
        %1033 = vmatprep.subr.mxu0 0.0
        %1034 = vmatpush1.xpose.msra.mxu0 %v969
        %1035 = vmatprep.subr.mxu0 0.0
        %1036 = vmatpush1.xpose.msra.mxu0 %v971
        %1037 = vmatprep.mubr.f32.mxu0 0.0
        %1038 = vmatmul.mubr.f32.gmra.mrb[0].mxu0 %v907
        %v1039 = vpop.f32.mrb[0].mxu0
        %v1040 = vadd.f32 0.0, %v1039
        %v1041 = vpop.f32.mrb[0].mxu0
        %v1042 = vadd.f32 0.0, %v1041
        %1043 = vdwg.mxu0
        %v1044 = vadd.f32 %v832, %v1040
        %v1045 = vadd.f32 %v833, %v1042
        %1046 = vset.pattern.permute.xlu0 2
        %1047 = vperm.xlu0 %1046, %v250
        %v1048 = vpop.permute.xlu0 %1047
        %v1050 = vmul.f32 %v1048, %v250
        %1052 = vrot.lane.b32.xlu0 %v1050, 126
        %v1053 = vpop.permute.xlu0 %1052
        %1054 = vrot.lane.b32.xlu0 %v212, 116
        %v1055 = vpop.permute.xlu0 %1054
        %1056 = vrot.lane.b32.xlu0 %v213, 116
        %v1057 = vpop.permute.xlu0 %1056
        %1058 = vrot.lane.b32.xlu0 %v214, 116
        %v1059 = vpop.permute.xlu0 %1058
        %1060 = vrot.lane.b32.xlu0 %v215, 116
        %v1061 = vpop.permute.xlu0 %1060
        %1062 = vrot.lane.b32.xlu0 %v216, 116
        %v1063 = vpop.permute.xlu0 %1062
        %1064 = vrot.lane.b32.xlu0 %v217, 116
        %v1065 = vpop.permute.xlu0 %1064
        %1066 = vrot.lane.b32.xlu0 %v218, 116
        %v1067 = vpop.permute.xlu0 %1066
        %1068 = vrot.lane.b32.xlu0 %v219, 116
        %v1069 = vpop.permute.xlu0 %1068
        %1070 = vrot.lane.b32.xlu0 %v220, 116
        %v1071 = vpop.permute.xlu0 %1070
        %1072 = vrot.lane.b32.xlu0 %v221, 116
        %v1073 = vpop.permute.xlu0 %1072
        %1074 = vrot.lane.b32.xlu0 %v222, 116
        %v1075 = vpop.permute.xlu0 %1074
        %1076 = vrot.lane.b32.xlu0 %v223, 116
        %v1077 = vpop.permute.xlu0 %1076
        %1078 = vrot.lane.b32.xlu0 %v224, 116
        %v1079 = vpop.permute.xlu0 %1078
        %1080 = vrot.lane.b32.xlu0 %v225, 116
        %v1081 = vpop.permute.xlu0 %1080
        %1082 = vrot.lane.b32.xlu0 %v226, 116
        %v1083 = vpop.permute.xlu0 %1082
        %1084 = vrot.lane.b32.xlu0 %v227, 116
        %v1085 = vpop.permute.xlu0 %1084
        %1086 = vrot.lane.b32.xlu0 %v228, 116
        %v1087 = vpop.permute.xlu0 %1086
        %1088 = vrot.lane.b32.xlu0 %v229, 116
        %v1089 = vpop.permute.xlu0 %1088
        %1090 = vrot.lane.b32.xlu0 %v230, 116
        %v1091 = vpop.permute.xlu0 %1090
        %1092 = vrot.lane.b32.xlu0 %v231, 116
        %v1093 = vpop.permute.xlu0 %1092
        %1094 = vrot.lane.b32.xlu0 %v232, 116
        %v1095 = vpop.permute.xlu0 %1094
        %1096 = vrot.lane.b32.xlu0 %v233, 116
        %v1097 = vpop.permute.xlu0 %1096
        %1098 = vrot.lane.b32.xlu0 %v234, 116
        %v1099 = vpop.permute.xlu0 %1098
        %1100 = vrot.lane.b32.xlu0 %v235, 116
        %v1101 = vpop.permute.xlu0 %1100
        %1102 = vrot.lane.b32.xlu0 %v236, 116
        %v1103 = vpop.permute.xlu0 %1102
        %1104 = vrot.lane.b32.xlu0 %v237, 116
        %v1105 = vpop.permute.xlu0 %1104
        %1106 = vrot.lane.b32.xlu0 %v238, 116
        %v1107 = vpop.permute.xlu0 %1106
        %1108 = vrot.lane.b32.xlu0 %v239, 116
        %v1109 = vpop.permute.xlu0 %1108
        %1110 = vrot.lane.b32.xlu0 %v240, 116
        %v1111 = vpop.permute.xlu0 %1110
        %1112 = vrot.lane.b32.xlu0 %v241, 116
        %v1113 = vpop.permute.xlu0 %1112
        %1114 = vrot.lane.b32.xlu0 %v242, 116
        %v1115 = vpop.permute.xlu0 %1114
        %1116 = vrot.lane.b32.xlu0 %v243, 116
        %v1117 = vpop.permute.xlu0 %1116
        %vm1118 = vcmask 15360
        %v1119 = vsel %vm1118, %v1053, 0
        %v1121 = vsel %vm1118, %v1055, 0
        %v1123 = vsel %vm1118, %v1057, 0
        %v1125 = vsel %vm1118, %v1059, 0
        %v1127 = vsel %vm1118, %v1061, 0
        %v1129 = vsel %vm1118, %v1063, 0
        %v1131 = vsel %vm1118, %v1065, 0
        %v1133 = vsel %vm1118, %v1067, 0
        %v1135 = vsel %vm1118, %v1069, 0
        %v1137 = vsel %vm1118, %v1071, 0
        %v1139 = vsel %vm1118, %v1073, 0
        %v1141 = vsel %vm1118, %v1075, 0
        %v1143 = vsel %vm1118, %v1077, 0
        %v1145 = vsel %vm1118, %v1079, 0
        %v1147 = vsel %vm1118, %v1081, 0
        %v1149 = vsel %vm1118, %v1083, 0
        %v1151 = vsel %vm1118, %v1085, 0
        %v1153 = vsel %vm1118, %v1087, 0
        %v1155 = vsel %vm1118, %v1089, 0
        %v1157 = vsel %vm1118, %v1091, 0
        %v1159 = vsel %vm1118, %v1093, 0
        %v1161 = vsel %vm1118, %v1095, 0
        %v1163 = vsel %vm1118, %v1097, 0
        %v1165 = vsel %vm1118, %v1099, 0
        %v1167 = vsel %vm1118, %v1101, 0
        %v1169 = vsel %vm1118, %v1103, 0
        %v1171 = vsel %vm1118, %v1105, 0
        %v1173 = vsel %vm1118, %v1107, 0
        %v1175 = vsel %vm1118, %v1109, 0
        %v1177 = vsel %vm1118, %v1111, 0
        %v1179 = vsel %vm1118, %v1113, 0
        %v1181 = vsel %vm1118, %v1115, 0
        %v1183 = vsel %vm1118, %v1117, 0
        %1185 = vmatprep.subr.mxu0 0.0
        %1186 = vmatpush1.xpose.msra.mxu0 %v1121
        %1187 = vmatprep.subr.mxu0 0.0
        %1188 = vmatpush1.xpose.msra.mxu0 %v1123
        %1189 = vmatprep.subr.mxu0 0.0
        %1190 = vmatpush1.xpose.msra.mxu0 %v1125
        %1191 = vmatprep.subr.mxu0 0.0
        %1192 = vmatpush1.xpose.msra.mxu0 %v1127
        %1193 = vmatprep.subr.mxu0 0.0
        %1194 = vmatpush1.xpose.msra.mxu0 %v1129
        %1195 = vmatprep.subr.mxu0 0.0
        %1196 = vmatpush1.xpose.msra.mxu0 %v1131
        %1197 = vmatprep.subr.mxu0 0.0
        %1198 = vmatpush1.xpose.msra.mxu0 %v1133
        %1199 = vmatprep.subr.mxu0 0.0
        %1200 = vmatpush1.xpose.msra.mxu0 %v1135
        %1201 = vmatprep.subr.mxu0 0.0
        %1202 = vmatpush1.xpose.msra.mxu0 %v1137
        %1203 = vmatprep.subr.mxu0 0.0
        %1204 = vmatpush1.xpose.msra.mxu0 %v1139
        %1205 = vmatprep.subr.mxu0 0.0
        %1206 = vmatpush1.xpose.msra.mxu0 %v1141
        %1207 = vmatprep.subr.mxu0 0.0
        %1208 = vmatpush1.xpose.msra.mxu0 %v1143
        %1209 = vmatprep.subr.mxu0 0.0
        %1210 = vmatpush1.xpose.msra.mxu0 %v1145
        %1211 = vmatprep.subr.mxu0 0.0
        %1212 = vmatpush1.xpose.msra.mxu0 %v1147
        %1213 = vmatprep.subr.mxu0 0.0
        %1214 = vmatpush1.xpose.msra.mxu0 %v1149
        %1215 = vmatprep.subr.mxu0 0.0
        %1216 = vmatpush1.xpose.msra.mxu0 %v1151
        %1217 = vmatprep.subr.mxu0 0.0
        %1218 = vmatpush1.xpose.msra.mxu0 %v1153
        %1219 = vmatprep.subr.mxu0 0.0
        %1220 = vmatpush1.xpose.msra.mxu0 %v1155
        %1221 = vmatprep.subr.mxu0 0.0
        %1222 = vmatpush1.xpose.msra.mxu0 %v1157
        %1223 = vmatprep.subr.mxu0 0.0
        %1224 = vmatpush1.xpose.msra.mxu0 %v1159
        %1225 = vmatprep.subr.mxu0 0.0
        %1226 = vmatpush1.xpose.msra.mxu0 %v1161
        %1227 = vmatprep.subr.mxu0 0.0
        %1228 = vmatpush1.xpose.msra.mxu0 %v1163
        %1229 = vmatprep.subr.mxu0 0.0
        %1230 = vmatpush1.xpose.msra.mxu0 %v1165
        %1231 = vmatprep.subr.mxu0 0.0
        %1232 = vmatpush1.xpose.msra.mxu0 %v1167
        %1233 = vmatprep.subr.mxu0 0.0
        %1234 = vmatpush1.xpose.msra.mxu0 %v1169
        %1235 = vmatprep.subr.mxu0 0.0
        %1236 = vmatpush1.xpose.msra.mxu0 %v1171
        %1237 = vmatprep.subr.mxu0 0.0
        %1238 = vmatpush1.xpose.msra.mxu0 %v1173
        %1239 = vmatprep.subr.mxu0 0.0
        %1240 = vmatpush1.xpose.msra.mxu0 %v1175
        %1241 = vmatprep.subr.mxu0 0.0
        %1242 = vmatpush1.xpose.msra.mxu0 %v1177
        %1243 = vmatprep.subr.mxu0 0.0
        %1244 = vmatpush1.xpose.msra.mxu0 %v1179
        %1245 = vmatprep.subr.mxu0 0.0
        %1246 = vmatpush1.xpose.msra.mxu0 %v1181
        %1247 = vmatprep.subr.mxu0 0.0
        %1248 = vmatpush1.xpose.msra.mxu0 %v1183
        %1249 = vmatprep.mubr.f32.mxu0 0.0
        %1250 = vmatmul.mubr.f32.gmra.mrb[0].mxu0 %v1119
        %v1251 = vpop.f32.mrb[0].mxu0
        %v1252 = vadd.f32 0.0, %v1251
        %v1253 = vpop.f32.mrb[0].mxu0
        %v1254 = vadd.f32 0.0, %v1253
        %1255 = vdwg.mxu0
        %v1256 = vadd.f32 %v1044, %v1252
        %v1257 = vadd.f32 %v1045, %v1254
        %v1258 = vmul.f32 %v250, %v250
        %1260 = vrot.lane.b32.xlu0 %v1258, 125
        %v1261 = vpop.permute.xlu0 %1260
        %1262 = vrot.lane.b32.xlu0 %v212, 114
        %v1263 = vpop.permute.xlu0 %1262
        %1264 = vrot.lane.b32.xlu0 %v213, 114
        %v1265 = vpop.permute.xlu0 %1264
        %1266 = vrot.lane.b32.xlu0 %v214, 114
        %v1267 = vpop.permute.xlu0 %1266
        %1268 = vrot.lane.b32.xlu0 %v215, 114
        %v1269 = vpop.permute.xlu0 %1268
        %1270 = vrot.lane.b32.xlu0 %v216, 114
        %v1271 = vpop.permute.xlu0 %1270
        %1272 = vrot.lane.b32.xlu0 %v217, 114
        %v1273 = vpop.permute.xlu0 %1272
        %1274 = vrot.lane.b32.xlu0 %v218, 114
        %v1275 = vpop.permute.xlu0 %1274
        %1276 = vrot.lane.b32.xlu0 %v219, 114
        %v1277 = vpop.permute.xlu0 %1276
        %1278 = vrot.lane.b32.xlu0 %v220, 114
        %v1279 = vpop.permute.xlu0 %1278
        %1280 = vrot.lane.b32.xlu0 %v221, 114
        %v1281 = vpop.permute.xlu0 %1280
        %1282 = vrot.lane.b32.xlu0 %v222, 114
        %v1283 = vpop.permute.xlu0 %1282
        %1284 = vrot.lane.b32.xlu0 %v223, 114
        %v1285 = vpop.permute.xlu0 %1284
        %1286 = vrot.lane.b32.xlu0 %v224, 114
        %v1287 = vpop.permute.xlu0 %1286
        %1288 = vrot.lane.b32.xlu0 %v225, 114
        %v1289 = vpop.permute.xlu0 %1288
        %1290 = vrot.lane.b32.xlu0 %v226, 114
        %v1291 = vpop.permute.xlu0 %1290
        %1292 = vrot.lane.b32.xlu0 %v227, 114
        %v1293 = vpop.permute.xlu0 %1292
        %1294 = vrot.lane.b32.xlu0 %v228, 114
        %v1295 = vpop.permute.xlu0 %1294
        %1296 = vrot.lane.b32.xlu0 %v229, 114
        %v1297 = vpop.permute.xlu0 %1296
        %1298 = vrot.lane.b32.xlu0 %v230, 114
        %v1299 = vpop.permute.xlu0 %1298
        %1300 = vrot.lane.b32.xlu0 %v231, 114
        %v1301 = vpop.permute.xlu0 %1300
        %1302 = vrot.lane.b32.xlu0 %v232, 114
        %v1303 = vpop.permute.xlu0 %1302
        %1304 = vrot.lane.b32.xlu0 %v233, 114
        %v1305 = vpop.permute.xlu0 %1304
        %1306 = vrot.lane.b32.xlu0 %v234, 114
        %v1307 = vpop.permute.xlu0 %1306
        %1308 = vrot.lane.b32.xlu0 %v235, 114
        %v1309 = vpop.permute.xlu0 %1308
        %1310 = vrot.lane.b32.xlu0 %v236, 114
        %v1311 = vpop.permute.xlu0 %1310
        %1312 = vrot.lane.b32.xlu0 %v237, 114
        %v1313 = vpop.permute.xlu0 %1312
        %1314 = vrot.lane.b32.xlu0 %v238, 114
        %v1315 = vpop.permute.xlu0 %1314
        %1316 = vrot.lane.b32.xlu0 %v239, 114
        %v1317 = vpop.permute.xlu0 %1316
        %1318 = vrot.lane.b32.xlu0 %v240, 114
        %v1319 = vpop.permute.xlu0 %1318
        %1320 = vrot.lane.b32.xlu0 %v241, 114
        %v1321 = vpop.permute.xlu0 %1320
        %1322 = vrot.lane.b32.xlu0 %v242, 114
        %v1323 = vpop.permute.xlu0 %1322
        %1324 = vrot.lane.b32.xlu0 %v243, 114
        %v1325 = vpop.permute.xlu0 %1324
        %v1326 = vsel %vm486, %v1261, 0
        %v1328 = vsel %vm486, %v1263, 0
        %v1330 = vsel %vm486, %v1265, 0
        %v1332 = vsel %vm486, %v1267, 0
        %v1334 = vsel %vm486, %v1269, 0
        %v1336 = vsel %vm486, %v1271, 0
        %v1338 = vsel %vm486, %v1273, 0
        %v1340 = vsel %vm486, %v1275, 0
        %v1342 = vsel %vm486, %v1277, 0
        %v1344 = vsel %vm486, %v1279, 0
        %v1346 = vsel %vm486, %v1281, 0
        %v1348 = vsel %vm486, %v1283, 0
        %v1350 = vsel %vm486, %v1285, 0
        %v1352 = vsel %vm486, %v1287, 0
        %v1354 = vsel %vm486, %v1289, 0
        %v1356 = vsel %vm486, %v1291, 0
        %v1358 = vsel %vm486, %v1293, 0
        %v1360 = vsel %vm486, %v1295, 0
        %v1362 = vsel %vm486, %v1297, 0
        %v1364 = vsel %vm486, %v1299, 0
        %v1366 = vsel %vm486, %v1301, 0
        %v1368 = vsel %vm486, %v1303, 0
        %v1370 = vsel %vm486, %v1305, 0
        %v1372 = vsel %vm486, %v1307, 0
        %v1374 = vsel %vm486, %v1309, 0
        %v1376 = vsel %vm486, %v1311, 0
        %v1378 = vsel %vm486, %v1313, 0
        %v1380 = vsel %vm486, %v1315, 0
        %v1382 = vsel %vm486, %v1317, 0
        %v1384 = vsel %vm486, %v1319, 0
        %v1386 = vsel %vm486, %v1321, 0
        %v1388 = vsel %vm486, %v1323, 0
        %v1390 = vsel %vm486, %v1325, 0
        %1392 = vmatprep.subr.mxu0 0.0
        %1393 = vmatpush1.xpose.msra.mxu0 %v1328
        %1394 = vmatprep.subr.mxu0 0.0
        %1395 = vmatpush1.xpose.msra.mxu0 %v1330
        %1396 = vmatprep.subr.mxu0 0.0
        %1397 = vmatpush1.xpose.msra.mxu0 %v1332
        %1398 = vmatprep.subr.mxu0 0.0
        %1399 = vmatpush1.xpose.msra.mxu0 %v1334
        %1400 = vmatprep.subr.mxu0 0.0
        %1401 = vmatpush1.xpose.msra.mxu0 %v1336
        %1402 = vmatprep.subr.mxu0 0.0
        %1403 = vmatpush1.xpose.msra.mxu0 %v1338
        %1404 = vmatprep.subr.mxu0 0.0
        %1405 = vmatpush1.xpose.msra.mxu0 %v1340
        %1406 = vmatprep.subr.mxu0 0.0
        %1407 = vmatpush1.xpose.msra.mxu0 %v1342
        %1408 = vmatprep.subr.mxu0 0.0
        %1409 = vmatpush1.xpose.msra.mxu0 %v1344
        %1410 = vmatprep.subr.mxu0 0.0
        %1411 = vmatpush1.xpose.msra.mxu0 %v1346
        %1412 = vmatprep.subr.mxu0 0.0
        %1413 = vmatpush1.xpose.msra.mxu0 %v1348
        %1414 = vmatprep.subr.mxu0 0.0
        %1415 = vmatpush1.xpose.msra.mxu0 %v1350
        %1416 = vmatprep.subr.mxu0 0.0
        %1417 = vmatpush1.xpose.msra.mxu0 %v1352
        %1418 = vmatprep.subr.mxu0 0.0
        %1419 = vmatpush1.xpose.msra.mxu0 %v1354
        %1420 = vmatprep.subr.mxu0 0.0
        %1421 = vmatpush1.xpose.msra.mxu0 %v1356
        %1422 = vmatprep.subr.mxu0 0.0
        %1423 = vmatpush1.xpose.msra.mxu0 %v1358
        %1424 = vmatprep.subr.mxu0 0.0
        %1425 = vmatpush1.xpose.msra.mxu0 %v1360
        %1426 = vmatprep.subr.mxu0 0.0
        %1427 = vmatpush1.xpose.msra.mxu0 %v1362
        %1428 = vmatprep.subr.mxu0 0.0
        %1429 = vmatpush1.xpose.msra.mxu0 %v1364
        %1430 = vmatprep.subr.mxu0 0.0
        %1431 = vmatpush1.xpose.msra.mxu0 %v1366
        %1432 = vmatprep.subr.mxu0 0.0
        %1433 = vmatpush1.xpose.msra.mxu0 %v1368
        %1434 = vmatprep.subr.mxu0 0.0
        %1435 = vmatpush1.xpose.msra.mxu0 %v1370
        %1436 = vmatprep.subr.mxu0 0.0
        %1437 = vmatpush1.xpose.msra.mxu0 %v1372
        %1438 = vmatprep.subr.mxu0 0.0
        %1439 = vmatpush1.xpose.msra.mxu0 %v1374
        %1440 = vmatprep.subr.mxu0 0.0
        %1441 = vmatpush1.xpose.msra.mxu0 %v1376
        %1442 = vmatprep.subr.mxu0 0.0
        %1443 = vmatpush1.xpose.msra.mxu0 %v1378
        %1444 = vmatprep.subr.mxu0 0.0
        %1445 = vmatpush1.xpose.msra.mxu0 %v1380
        %1446 = vmatprep.subr.mxu0 0.0
        %1447 = vmatpush1.xpose.msra.mxu0 %v1382
        %1448 = vmatprep.subr.mxu0 0.0
        %1449 = vmatpush1.xpose.msra.mxu0 %v1384
        %1450 = vmatprep.subr.mxu0 0.0
        %1451 = vmatpush1.xpose.msra.mxu0 %v1386
        %1452 = vmatprep.subr.mxu0 0.0
        %1453 = vmatpush1.xpose.msra.mxu0 %v1388
        %1454 = vmatprep.subr.mxu0 0.0
        %1455 = vmatpush1.xpose.msra.mxu0 %v1390
        %1456 = vmatprep.mubr.f32.mxu0 0.0
        %1457 = vmatmul.mubr.f32.gmra.mrb[0].mxu0 %v1326
        %v1458 = vpop.f32.mrb[0].mxu0
        %v1459 = vadd.f32 0.0, %v1458
        %v1460 = vpop.f32.mrb[0].mxu0
        %v1461 = vadd.f32 0.0, %v1460
        %1462 = vdwg.mxu0
        %v1463 = vadd.f32 %v1256, %v1459
        %v1464 = vadd.f32 %v1257, %v1461
        %v1465 = vadd.f32 %v1463, %v1464
        %1466 = vadd.xlane.f32.xlu0 %v1465
        %v1467 = vpop.xlane.xlu0 %1466
        %v1468 = vmul.f32 %v1467, 0.00390625
        %v1469 = vsub.f32 %v1463, %v1468
        %v1470 = vsub.f32 %v1464, %v1468
        %1471 = vmatprep.subr.mxu0 %v1470
        %1472 = vmatpush1.xpose.msra.mxu0 %v1469
        %1473 = vmatprep.subr.mxu0 0.0
        %1474 = vmatpush1.xpose.msra.mxu0 0.0
        %1475 = vmatprep.subr.mxu0 0.0
        %1476 = vmatpush1.xpose.msra.mxu0 0.0
        %1477 = vmatprep.subr.mxu0 0.0
        %1478 = vmatpush1.xpose.msra.mxu0 0.0
        %1479 = vmatprep.subr.mxu0 0.0
        %1480 = vmatpush1.xpose.msra.mxu0 0.0
        %1481 = vmatprep.subr.mxu0 0.0
        %1482 = vmatpush1.xpose.msra.mxu0 0.0
        %1483 = vmatprep.subr.mxu0 0.0
        %1484 = vmatpush1.xpose.msra.mxu0 0.0
        %1485 = vmatprep.subr.mxu0 0.0
        %1486 = vmatpush1.xpose.msra.mxu0 0.0
        %1487 = vmatprep.subr.mxu0 0.0
        %1488 = vmatpush1.xpose.msra.mxu0 0.0
        %1489 = vmatprep.subr.mxu0 0.0
        %1490 = vmatpush1.xpose.msra.mxu0 0.0
        %1491 = vmatprep.subr.mxu0 0.0
        %1492 = vmatpush1.xpose.msra.mxu0 0.0
        %1493 = vmatprep.subr.mxu0 0.0
        %1494 = vmatpush1.xpose.msra.mxu0 0.0
        %1495 = vmatprep.subr.mxu0 0.0
        %1496 = vmatpush1.xpose.msra.mxu0 0.0
        %1497 = vmatprep.subr.mxu0 0.0
        %1498 = vmatpush1.xpose.msra.mxu0 0.0
        %1499 = vmatprep.subr.mxu0 0.0
        %1500 = vmatpush1.xpose.msra.mxu0 0.0
        %1501 = vmatprep.subr.mxu0 0.0
        %1502 = vmatpush1.xpose.msra.mxu0 0.0
        %1503 = vmatprep.subr.mxu0 0.0
        %1504 = vmatpush1.xpose.msra.mxu0 0.0
        %1505 = vmatprep.subr.mxu0 0.0
        %1506 = vmatpush1.xpose.msra.mxu0 0.0
        %1507 = vmatprep.subr.mxu0 0.0
        %1508 = vmatpush1.xpose.msra.mxu0 0.0
        %1509 = vmatprep.subr.mxu0 0.0
        %1510 = vmatpush1.xpose.msra.mxu0 0.0
        %1511 = vmatprep.subr.mxu0 0.0
        %1512 = vmatpush1.xpose.msra.mxu0 0.0
        %1513 = vmatprep.subr.mxu0 0.0
        %1514 = vmatpush1.xpose.msra.mxu0 0.0
        %1515 = vmatprep.subr.mxu0 0.0
        %1516 = vmatpush1.xpose.msra.mxu0 0.0
        %1517 = vmatprep.subr.mxu0 0.0
        %1518 = vmatpush1.xpose.msra.mxu0 0.0
        %1519 = vmatprep.subr.mxu0 0.0
        %1520 = vmatpush1.xpose.msra.mxu0 0.0
        %1521 = vmatprep.subr.mxu0 0.0
        %1522 = vmatpush1.xpose.msra.mxu0 0.0
        %1523 = vmatprep.subr.mxu0 0.0
        %1524 = vmatpush1.xpose.msra.mxu0 0.0
        %1525 = vmatprep.subr.mxu0 0.0
        %1526 = vmatpush1.xpose.msra.mxu0 0.0
        %1527 = vmatprep.subr.mxu0 0.0
        %1528 = vmatpush1.xpose.msra.mxu0 0.0
        %1529 = vmatprep.subr.mxu0 0.0
        %1530 = vmatpush1.xpose.msra.mxu0 0.0
        %1531 = vmatprep.subr.mxu0 0.0
        %1532 = vmatpush1.xpose.msra.mxu0 0.0
        %1533 = vmatprep.subr.mxu0 0.0
        %1534 = vmatpush1.xpose.msra.mxu0 0.0
        %1535 = vmatprep.mubr.f32.mxu0 %v1470
        %1536 = vmatmul.mubr.f32.gmra.mrb[0].mxu0 %v1469
        %v1537 = vpop.f32.mrb[0].mxu0
        %v1538 = vadd.f32 0.0, %v1537
        %v1539 = vpop.f32.mrb[0].mxu0
        %1540 = vdwg.mxu0
        %v1541 = vmul.f32 %v1538, 0.003921569
        %v1542 = vstv %s244
        %v1543 = vadd.f32 %v1541, %v1542
        %v1544 = vsel %vm249, %v1543, %v1541
        %vm1545 = vcmask 64512
        %1546 = vst.msk [vmem:[%s203] sm:$0xff] %vm1545, %v1544
        %1547 = vmatprep.subr.mxu0 %v1464
        %1548 = vmatpush1.xpose.msra.mxu0 %v1463
        %1549 = vmatprep.subr.mxu0 0.0
        %1550 = vmatpush1.xpose.msra.mxu0 0.0
        %1551 = vmatprep.subr.mxu0 0.0
        %1552 = vmatpush1.xpose.msra.mxu0 0.0
        %1553 = vmatprep.subr.mxu0 0.0
        %1554 = vmatpush1.xpose.msra.mxu0 0.0
        %1555 = vmatprep.subr.mxu0 0.0
        %1556 = vmatpush1.xpose.msra.mxu0 0.0
        %1557 = vmatprep.subr.mxu0 0.0
        %1558 = vmatpush1.xpose.msra.mxu0 0.0
        %1559 = vmatprep.subr.mxu0 0.0
        %1560 = vmatpush1.xpose.msra.mxu0 0.0
        %1561 = vmatprep.subr.mxu0 0.0
        %1562 = vmatpush1.xpose.msra.mxu0 0.0
        %1563 = vmatprep.subr.mxu0 0.0
        %1564 = vmatpush1.xpose.msra.mxu0 0.0
        %1565 = vmatprep.subr.mxu0 0.0
        %1566 = vmatpush1.xpose.msra.mxu0 0.0
        %1567 = vmatprep.subr.mxu0 0.0
        %1568 = vmatpush1.xpose.msra.mxu0 0.0
        %1569 = vmatprep.subr.mxu0 0.0
        %1570 = vmatpush1.xpose.msra.mxu0 0.0
        %1571 = vmatprep.subr.mxu0 0.0
        %1572 = vmatpush1.xpose.msra.mxu0 0.0
        %1573 = vmatprep.subr.mxu0 0.0
        %1574 = vmatpush1.xpose.msra.mxu0 0.0
        %1575 = vmatprep.subr.mxu0 0.0
        %1576 = vmatpush1.xpose.msra.mxu0 0.0
        %1577 = vmatprep.subr.mxu0 0.0
        %1578 = vmatpush1.xpose.msra.mxu0 0.0
        %1579 = vmatprep.subr.mxu0 0.0
        %1580 = vmatpush1.xpose.msra.mxu0 0.0
        %1581 = vmatprep.subr.mxu0 0.0
        %1582 = vmatpush1.xpose.msra.mxu0 0.0
        %1583 = vmatprep.subr.mxu0 0.0
        %1584 = vmatpush1.xpose.msra.mxu0 0.0
        %1585 = vmatprep.subr.mxu0 0.0
        %1586 = vmatpush1.xpose.msra.mxu0 0.0
        %1587 = vmatprep.subr.mxu0 0.0
        %1588 = vmatpush1.xpose.msra.mxu0 0.0
        %1589 = vmatprep.subr.mxu0 0.0
        %1590 = vmatpush1.xpose.msra.mxu0 0.0
        %1591 = vmatprep.subr.mxu0 0.0
        %1592 = vmatpush1.xpose.msra.mxu0 0.0
        %1593 = vmatprep.subr.mxu0 0.0
        %1594 = vmatpush1.xpose.msra.mxu0 0.0
        %1595 = vmatprep.subr.mxu0 0.0
        %1596 = vmatpush1.xpose.msra.mxu0 0.0
        %1597 = vmatprep.subr.mxu0 0.0
        %1598 = vmatpush1.xpose.msra.mxu0 0.0
        %1599 = vmatprep.subr.mxu0 0.0
        %1600 = vmatpush1.xpose.msra.mxu0 0.0
        %1601 = vmatprep.subr.mxu0 0.0
        %1602 = vmatpush1.xpose.msra.mxu0 0.0
        %1603 = vmatprep.subr.mxu0 0.0
        %1604 = vmatpush1.xpose.msra.mxu0 0.0
        %1605 = vmatprep.subr.mxu0 0.0
        %1606 = vmatpush1.xpose.msra.mxu0 0.0
        %1607 = vmatprep.subr.mxu0 0.0
        %1608 = vmatpush1.xpose.msra.mxu0 0.0
        %1609 = vmatprep.subr.mxu0 0.0
        %1610 = vmatpush1.xpose.msra.mxu0 0.0
        %1611 = vmatprep.mubr.f32.mxu0 1.0
        %1612 = vmatmul.mubr.f32.gmra.mrb[0].mxu0 1.0
        %v1613 = vpop.f32.mrb[0].mxu0
        %v1614 = vadd.f32 0.0, %v1613
        %v1615 = vpop.f32.mrb[0].mxu0
        %1616 = vdwg.mxu0
        %v1617 = vmul.f32 %v1614, 0.00390625
        %vm1618 = vcmask 57344
        %1619 = vst.msk [vmem:[%s196] sm:$0x1] %vm1618, %v1617
        %s1620 = scalar_lea.vmem %s208, 8
        %v1621 = vld [vmem:[%s1620] sm:$0xff]
        %v1623 = vsel %vm347, %v1621, 0
        %1625 = vmatprep.subr.mxu0 0.0
        %1626 = vmatpush1.xpose.msra.mxu0 %v351
        %1627 = vmatprep.subr.mxu0 0.0
        %1628 = vmatpush1.xpose.msra.mxu0 %v353
        %1629 = vmatprep.subr.mxu0 0.0
        %1630 = vmatpush1.xpose.msra.mxu0 %v355
        %1631 = vmatprep.subr.mxu0 0.0
        %1632 = vmatpush1.xpose.msra.mxu0 %v357
        %1633 = vmatprep.subr.mxu0 0.0
        %1634 = vmatpush1.xpose.msra.mxu0 %v359
        %1635 = vmatprep.subr.mxu0 0.0
        %1636 = vmatpush1.xpose.msra.mxu0 %v361
        %1637 = vmatprep.subr.mxu0 0.0
        %1638 = vmatpush1.xpose.msra.mxu0 %v363
        %1639 = vmatprep.subr.mxu0 0.0
        %1640 = vmatpush1.xpose.msra.mxu0 %v365
        %1641 = vmatprep.subr.mxu0 0.0
        %1642 = vmatpush1.xpose.msra.mxu0 %v367
        %1643 = vmatprep.subr.mxu0 0.0
        %1644 = vmatpush1.xpose.msra.mxu0 %v369
        %1645 = vmatprep.subr.mxu0 0.0
        %1646 = vmatpush1.xpose.msra.mxu0 %v371
        %1647 = vmatprep.subr.mxu0 0.0
        %1648 = vmatpush1.xpose.msra.mxu0 %v373
        %1649 = vmatprep.subr.mxu0 0.0
        %1650 = vmatpush1.xpose.msra.mxu0 %v375
        %1651 = vmatprep.subr.mxu0 0.0
        %1652 = vmatpush1.xpose.msra.mxu0 %v377
        %1653 = vmatprep.subr.mxu0 0.0
        %1654 = vmatpush1.xpose.msra.mxu0 %v379
        %1655 = vmatprep.subr.mxu0 0.0
        %1656 = vmatpush1.xpose.msra.mxu0 %v381
        %1657 = vmatprep.subr.mxu0 0.0
        %1658 = vmatpush1.xpose.msra.mxu0 %v383
        %1659 = vmatprep.subr.mxu0 0.0
        %1660 = vmatpush1.xpose.msra.mxu0 %v385
        %1661 = vmatprep.subr.mxu0 0.0
        %1662 = vmatpush1.xpose.msra.mxu0 %v387
        %1663 = vmatprep.subr.mxu0 0.0
        %1664 = vmatpush1.xpose.msra.mxu0 %v389
        %1665 = vmatprep.subr.mxu0 0.0
        %1666 = vmatpush1.xpose.msra.mxu0 %v391
        %1667 = vmatprep.subr.mxu0 0.0
        %1668 = vmatpush1.xpose.msra.mxu0 %v393
        %1669 = vmatprep.subr.mxu0 0.0
        %1670 = vmatpush1.xpose.msra.mxu0 %v395
        %1671 = vmatprep.subr.mxu0 0.0
        %1672 = vmatpush1.xpose.msra.mxu0 %v397
        %1673 = vmatprep.subr.mxu0 0.0
        %1674 = vmatpush1.xpose.msra.mxu0 %v399
        %1675 = vmatprep.subr.mxu0 0.0
        %1676 = vmatpush1.xpose.msra.mxu0 %v401
        %1677 = vmatprep.subr.mxu0 0.0
        %1678 = vmatpush1.xpose.msra.mxu0 %v403
        %1679 = vmatprep.subr.mxu0 0.0
        %1680 = vmatpush1.xpose.msra.mxu0 %v405
        %1681 = vmatprep.subr.mxu0 0.0
        %1682 = vmatpush1.xpose.msra.mxu0 %v407
        %1683 = vmatprep.subr.mxu0 0.0
        %1684 = vmatpush1.xpose.msra.mxu0 %v409
        %1685 = vmatprep.subr.mxu0 0.0
        %1686 = vmatpush1.xpose.msra.mxu0 %v411
        %1687 = vmatprep.subr.mxu0 0.0
        %1688 = vmatpush1.xpose.msra.mxu0 %v413
        %1689 = vmatprep.mubr.f32.mxu0 0.0
        %1690 = vmatmul.mubr.f32.gmra.mrb[0].mxu0 %v1623
        %v1691 = vpop.f32.mrb[0].mxu0
        %v1692 = vadd.f32 0.0, %v1691
        %v1693 = vpop.f32.mrb[0].mxu0
        %v1694 = vadd.f32 0.0, %v1693
        %1695 = vdwg.mxu0
        %1696 = vmatprep.subr.mxu0 0.0
        %1697 = vmatpush1.xpose.msra.mxu0 %v490
        %1698 = vmatprep.subr.mxu0 0.0
        %1699 = vmatpush1.xpose.msra.mxu0 %v492
        %1700 = vmatprep.subr.mxu0 0.0
        %1701 = vmatpush1.xpose.msra.mxu0 %v494
        %1702 = vmatprep.subr.mxu0 0.0
        %1703 = vmatpush1.xpose.msra.mxu0 %v496
        %1704 = vmatprep.subr.mxu0 0.0
        %1705 = vmatpush1.xpose.msra.mxu0 %v498
        %1706 = vmatprep.subr.mxu0 0.0
        %1707 = vmatpush1.xpose.msra.mxu0 %v500
        %1708 = vmatprep.subr.mxu0 0.0
        %1709 = vmatpush1.xpose.msra.mxu0 %v502
        %1710 = vmatprep.subr.mxu0 0.0
        %1711 = vmatpush1.xpose.msra.mxu0 %v504
        %1712 = vmatprep.subr.mxu0 0.0
        %1713 = vmatpush1.xpose.msra.mxu0 %v506
        %1714 = vmatprep.subr.mxu0 0.0
        %1715 = vmatpush1.xpose.msra.mxu0 %v508
        %1716 = vmatprep.subr.mxu0 0.0
        %1717 = vmatpush1.xpose.msra.mxu0 %v510
        %1718 = vmatprep.subr.mxu0 0.0
        %1719 = vmatpush1.xpose.msra.mxu0 %v512
        %1720 = vmatprep.subr.mxu0 0.0
        %1721 = vmatpush1.xpose.msra.mxu0 %v514
        %1722 = vmatprep.subr.mxu0 0.0
        %1723 = vmatpush1.xpose.msra.mxu0 %v516
        %1724 = vmatprep.subr.mxu0 0.0
        %1725 = vmatpush1.xpose.msra.mxu0 %v518
        %1726 = vmatprep.subr.mxu0 0.0
        %1727 = vmatpush1.xpose.msra.mxu0 %v520
        %1728 = vmatprep.subr.mxu0 0.0
        %1729 = vmatpush1.xpose.msra.mxu0 %v522
        %1730 = vmatprep.subr.mxu0 0.0
        %1731 = vmatpush1.xpose.msra.mxu0 %v524
        %1732 = vmatprep.subr.mxu0 0.0
        %1733 = vmatpush1.xpose.msra.mxu0 %v526
        %1734 = vmatprep.subr.mxu0 0.0
        %1735 = vmatpush1.xpose.msra.mxu0 %v528
        %1736 = vmatprep.subr.mxu0 0.0
        %1737 = vmatpush1.xpose.msra.mxu0 %v530
        %1738 = vmatprep.subr.mxu0 0.0
        %1739 = vmatpush1.xpose.msra.mxu0 %v532
        %1740 = vmatprep.subr.mxu0 0.0
        %1741 = vmatpush1.xpose.msra.mxu0 %v534
        %1742 = vmatprep.subr.mxu0 0.0
        %1743 = vmatpush1.xpose.msra.mxu0 %v536
        %1744 = vmatprep.subr.mxu0 0.0
        %1745 = vmatpush1.xpose.msra.mxu0 %v538
        %1746 = vmatprep.subr.mxu0 0.0
        %1747 = vmatpush1.xpose.msra.mxu0 %v540
        %1748 = vmatprep.subr.mxu0 0.0
        %1749 = vmatpush1.xpose.msra.mxu0 %v542
        %1750 = vmatprep.subr.mxu0 0.0
        %1751 = vmatpush1.xpose.msra.mxu0 %v544
        %1752 = vmatprep.subr.mxu0 0.0
        %1753 = vmatpush1.xpose.msra.mxu0 %v546
        %1754 = vmatprep.subr.mxu0 0.0
        %1755 = vmatpush1.xpose.msra.mxu0 %v548
        %1756 = vmatprep.subr.mxu0 0.0
        %1757 = vmatpush1.xpose.msra.mxu0 %v550
        %1758 = vmatprep.subr.mxu0 0.0
        %1759 = vmatpush1.xpose.msra.mxu0 %v552
        %1760 = vmatprep.mubr.f32.mxu0 0.0
        %1761 = vmatmul.mubr.f32.gmra.mrb[0].mxu0 %v488
        %v1762 = vpop.f32.mrb[0].mxu0
        %v1763 = vadd.f32 %v1692, %v1762
        %v1764 = vpop.f32.mrb[0].mxu0
        %v1765 = vadd.f32 %v1694, %v1764
        %1766 = vdwg.mxu0
        %1767 = vset.pattern.permute.xlu0 0
        %1768 = vperm.xlu0 %1767, %v1621
        %v1769 = vpop.permute.xlu0 %1768
        %v1771 = vmul.f32 %v1769, %v1621
        %v1773 = vsel %vm347, %v1771, 0
        %1775 = vmatprep.subr.mxu0 0.0
        %1776 = vmatpush1.xpose.msra.mxu0 %v697
        %1777 = vmatprep.subr.mxu0 0.0
        %1778 = vmatpush1.xpose.msra.mxu0 %v699
        %1779 = vmatprep.subr.mxu0 0.0
        %1780 = vmatpush1.xpose.msra.mxu0 %v701
        %1781 = vmatprep.subr.mxu0 0.0
        %1782 = vmatpush1.xpose.msra.mxu0 %v703
        %1783 = vmatprep.subr.mxu0 0.0
        %1784 = vmatpush1.xpose.msra.mxu0 %v705
        %1785 = vmatprep.subr.mxu0 0.0
        %1786 = vmatpush1.xpose.msra.mxu0 %v707
        %1787 = vmatprep.subr.mxu0 0.0
        %1788 = vmatpush1.xpose.msra.mxu0 %v709
        %1789 = vmatprep.subr.mxu0 0.0
        %1790 = vmatpush1.xpose.msra.mxu0 %v711
        %1791 = vmatprep.subr.mxu0 0.0
        %1792 = vmatpush1.xpose.msra.mxu0 %v713
        %1793 = vmatprep.subr.mxu0 0.0
        %1794 = vmatpush1.xpose.msra.mxu0 %v715
        %1795 = vmatprep.subr.mxu0 0.0
        %1796 = vmatpush1.xpose.msra.mxu0 %v717
        %1797 = vmatprep.subr.mxu0 0.0
        %1798 = vmatpush1.xpose.msra.mxu0 %v719
        %1799 = vmatprep.subr.mxu0 0.0
        %1800 = vmatpush1.xpose.msra.mxu0 %v721
        %1801 = vmatprep.subr.mxu0 0.0
        %1802 = vmatpush1.xpose.msra.mxu0 %v723
        %1803 = vmatprep.subr.mxu0 0.0
        %1804 = vmatpush1.xpose.msra.mxu0 %v725
        %1805 = vmatprep.subr.mxu0 0.0
        %1806 = vmatpush1.xpose.msra.mxu0 %v727
        %1807 = vmatprep.subr.mxu0 0.0
        %1808 = vmatpush1.xpose.msra.mxu0 %v729
        %1809 = vmatprep.subr.mxu0 0.0
        %1810 = vmatpush1.xpose.msra.mxu0 %v731
        %1811 = vmatprep.subr.mxu0 0.0
        %1812 = vmatpush1.xpose.msra.mxu0 %v733
        %1813 = vmatprep.subr.mxu0 0.0
        %1814 = vmatpush1.xpose.msra.mxu0 %v735
        %1815 = vmatprep.subr.mxu0 0.0
        %1816 = vmatpush1.xpose.msra.mxu0 %v737
        %1817 = vmatprep.subr.mxu0 0.0
        %1818 = vmatpush1.xpose.msra.mxu0 %v739
        %1819 = vmatprep.subr.mxu0 0.0
        %1820 = vmatpush1.xpose.msra.mxu0 %v741
        %1821 = vmatprep.subr.mxu0 0.0
        %1822 = vmatpush1.xpose.msra.mxu0 %v743
        %1823 = vmatprep.subr.mxu0 0.0
        %1824 = vmatpush1.xpose.msra.mxu0 %v745
        %1825 = vmatprep.subr.mxu0 0.0
        %1826 = vmatpush1.xpose.msra.mxu0 %v747
        %1827 = vmatprep.subr.mxu0 0.0
        %1828 = vmatpush1.xpose.msra.mxu0 %v749
        %1829 = vmatprep.subr.mxu0 0.0
        %1830 = vmatpush1.xpose.msra.mxu0 %v751
        %1831 = vmatprep.subr.mxu0 0.0
        %1832 = vmatpush1.xpose.msra.mxu0 %v753
        %1833 = vmatprep.subr.mxu0 0.0
        %1834 = vmatpush1.xpose.msra.mxu0 %v755
        %1835 = vmatprep.subr.mxu0 0.0
        %1836 = vmatpush1.xpose.msra.mxu0 %v757
        %1837 = vmatprep.subr.mxu0 0.0
        %1838 = vmatpush1.xpose.msra.mxu0 %v759
        %1839 = vmatprep.mubr.f32.mxu0 0.0
        %1840 = vmatmul.mubr.f32.gmra.mrb[0].mxu0 %v1773
        %v1841 = vpop.f32.mrb[0].mxu0
        %v1842 = vadd.f32 0.0, %v1841
        %v1843 = vpop.f32.mrb[0].mxu0
        %v1844 = vadd.f32 0.0, %v1843
        %1845 = vdwg.mxu0
        %v1846 = vadd.f32 %v1763, %v1842
        %v1847 = vadd.f32 %v1765, %v1844
        %1848 = vset.pattern.permute.xlu0 1
        %1849 = vperm.xlu0 %1848, %v1621
        %v1850 = vpop.permute.xlu0 %1849
        %v1852 = vmul.f32 %v1850, %v1621
        %1854 = vrot.lane.b32.xlu0 %v1852, 127
        %v1855 = vpop.permute.xlu0 %1854
        %v1856 = vsel %vm906, %v1855, 0
        %1858 = vmatprep.subr.mxu0 0.0
        %1859 = vmatpush1.xpose.msra.mxu0 %v909
        %1860 = vmatprep.subr.mxu0 0.0
        %1861 = vmatpush1.xpose.msra.mxu0 %v911
        %1862 = vmatprep.subr.mxu0 0.0
        %1863 = vmatpush1.xpose.msra.mxu0 %v913
        %1864 = vmatprep.subr.mxu0 0.0
        %1865 = vmatpush1.xpose.msra.mxu0 %v915
        %1866 = vmatprep.subr.mxu0 0.0
        %1867 = vmatpush1.xpose.msra.mxu0 %v917
        %1868 = vmatprep.subr.mxu0 0.0
        %1869 = vmatpush1.xpose.msra.mxu0 %v919
        %1870 = vmatprep.subr.mxu0 0.0
        %1871 = vmatpush1.xpose.msra.mxu0 %v921
        %1872 = vmatprep.subr.mxu0 0.0
        %1873 = vmatpush1.xpose.msra.mxu0 %v923
        %1874 = vmatprep.subr.mxu0 0.0
        %1875 = vmatpush1.xpose.msra.mxu0 %v925
        %1876 = vmatprep.subr.mxu0 0.0
        %1877 = vmatpush1.xpose.msra.mxu0 %v927
        %1878 = vmatprep.subr.mxu0 0.0
        %1879 = vmatpush1.xpose.msra.mxu0 %v929
        %1880 = vmatprep.subr.mxu0 0.0
        %1881 = vmatpush1.xpose.msra.mxu0 %v931
        %1882 = vmatprep.subr.mxu0 0.0
        %1883 = vmatpush1.xpose.msra.mxu0 %v933
        %1884 = vmatprep.subr.mxu0 0.0
        %1885 = vmatpush1.xpose.msra.mxu0 %v935
        %1886 = vmatprep.subr.mxu0 0.0
        %1887 = vmatpush1.xpose.msra.mxu0 %v937
        %1888 = vmatprep.subr.mxu0 0.0
        %1889 = vmatpush1.xpose.msra.mxu0 %v939
        %1890 = vmatprep.subr.mxu0 0.0
        %1891 = vmatpush1.xpose.msra.mxu0 %v941
        %1892 = vmatprep.subr.mxu0 0.0
        %1893 = vmatpush1.xpose.msra.mxu0 %v943
        %1894 = vmatprep.subr.mxu0 0.0
        %1895 = vmatpush1.xpose.msra.mxu0 %v945
        %1896 = vmatprep.subr.mxu0 0.0
        %1897 = vmatpush1.xpose.msra.mxu0 %v947
        %1898 = vmatprep.subr.mxu0 0.0
        %1899 = vmatpush1.xpose.msra.mxu0 %v949
        %1900 = vmatprep.subr.mxu0 0.0
        %1901 = vmatpush1.xpose.msra.mxu0 %v951
        %1902 = vmatprep.subr.mxu0 0.0
        %1903 = vmatpush1.xpose.msra.mxu0 %v953
        %1904 = vmatprep.subr.mxu0 0.0
        %1905 = vmatpush1.xpose.msra.mxu0 %v955
        %1906 = vmatprep.subr.mxu0 0.0
        %1907 = vmatpush1.xpose.msra.mxu0 %v957
        %1908 = vmatprep.subr.mxu0 0.0
        %1909 = vmatpush1.xpose.msra.mxu0 %v959
        %1910 = vmatprep.subr.mxu0 0.0
        %1911 = vmatpush1.xpose.msra.mxu0 %v961
        %1912 = vmatprep.subr.mxu0 0.0
        %1913 = vmatpush1.xpose.msra.mxu0 %v963
        %1914 = vmatprep.subr.mxu0 0.0
        %1915 = vmatpush1.xpose.msra.mxu0 %v965
        %1916 = vmatprep.subr.mxu0 0.0
        %1917 = vmatpush1.xpose.msra.mxu0 %v967
        %1918 = vmatprep.subr.mxu0 0.0
        %1919 = vmatpush1.xpose.msra.mxu0 %v969
        %1920 = vmatprep.subr.mxu0 0.0
        %1921 = vmatpush1.xpose.msra.mxu0 %v971
        %1922 = vmatprep.mubr.f32.mxu0 0.0
        %1923 = vmatmul.mubr.f32.gmra.mrb[0].mxu0 %v1856
        %v1924 = vpop.f32.mrb[0].mxu0
        %v1925 = vadd.f32 0.0, %v1924
        %v1926 = vpop.f32.mrb[0].mxu0
        %v1927 = vadd.f32 0.0, %v1926
        %1928 = vdwg.mxu0
        %v1929 = vadd.f32 %v1846, %v1925
        %v1930 = vadd.f32 %v1847, %v1927
        %1931 = vset.pattern.permute.xlu0 2
        %1932 = vperm.xlu0 %1931, %v1621
        %v1933 = vpop.permute.xlu0 %1932
        %v1935 = vmul.f32 %v1933, %v1621
        %1937 = vrot.lane.b32.xlu0 %v1935, 126
        %v1938 = vpop.permute.xlu0 %1937
        %v1939 = vsel %vm1118, %v1938, 0
        %1941 = vmatprep.subr.mxu0 0.0
        %1942 = vmatpush1.xpose.msra.mxu0 %v1121
        %1943 = vmatprep.subr.mxu0 0.0
        %1944 = vmatpush1.xpose.msra.mxu0 %v1123
        %1945 = vmatprep.subr.mxu0 0.0
        %1946 = vmatpush1.xpose.msra.mxu0 %v1125
        %1947 = vmatprep.subr.mxu0 0.0
        %1948 = vmatpush1.xpose.msra.mxu0 %v1127
        %1949 = vmatprep.subr.mxu0 0.0
        %1950 = vmatpush1.xpose.msra.mxu0 %v1129
        %1951 = vmatprep.subr.mxu0 0.0
        %1952 = vmatpush1.xpose.msra.mxu0 %v1131
        %1953 = vmatprep.subr.mxu0 0.0
        %1954 = vmatpush1.xpose.msra.mxu0 %v1133
        %1955 = vmatprep.subr.mxu0 0.0
        %1956 = vmatpush1.xpose.msra.mxu0 %v1135
        %1957 = vmatprep.subr.mxu0 0.0
        %1958 = vmatpush1.xpose.msra.mxu0 %v1137
        %1959 = vmatprep.subr.mxu0 0.0
        %1960 = vmatpush1.xpose.msra.mxu0 %v1139
        %1961 = vmatprep.subr.mxu0 0.0
        %1962 = vmatpush1.xpose.msra.mxu0 %v1141
        %1963 = vmatprep.subr.mxu0 0.0
        %1964 = vmatpush1.xpose.msra.mxu0 %v1143
        %1965 = vmatprep.subr.mxu0 0.0
        %1966 = vmatpush1.xpose.msra.mxu0 %v1145
        %1967 = vmatprep.subr.mxu0 0.0
        %1968 = vmatpush1.xpose.msra.mxu0 %v1147
        %1969 = vmatprep.subr.mxu0 0.0
        %1970 = vmatpush1.xpose.msra.mxu0 %v1149
        %1971 = vmatprep.subr.mxu0 0.0
        %1972 = vmatpush1.xpose.msra.mxu0 %v1151
        %1973 = vmatprep.subr.mxu0 0.0
        %1974 = vmatpush1.xpose.msra.mxu0 %v1153
        %1975 = vmatprep.subr.mxu0 0.0
        %1976 = vmatpush1.xpose.msra.mxu0 %v1155
        %1977 = vmatprep.subr.mxu0 0.0
        %1978 = vmatpush1.xpose.msra.mxu0 %v1157
        %1979 = vmatprep.subr.mxu0 0.0
        %1980 = vmatpush1.xpose.msra.mxu0 %v1159
        %1981 = vmatprep.subr.mxu0 0.0
        %1982 = vmatpush1.xpose.msra.mxu0 %v1161
        %1983 = vmatprep.subr.mxu0 0.0
        %1984 = vmatpush1.xpose.msra.mxu0 %v1163
        %1985 = vmatprep.subr.mxu0 0.0
        %1986 = vmatpush1.xpose.msra.mxu0 %v1165
        %1987 = vmatprep.subr.mxu0 0.0
        %1988 = vmatpush1.xpose.msra.mxu0 %v1167
        %1989 = vmatprep.subr.mxu0 0.0
        %1990 = vmatpush1.xpose.msra.mxu0 %v1169
        %1991 = vmatprep.subr.mxu0 0.0
        %1992 = vmatpush1.xpose.msra.mxu0 %v1171
        %1993 = vmatprep.subr.mxu0 0.0
        %1994 = vmatpush1.xpose.msra.mxu0 %v1173
        %1995 = vmatprep.subr.mxu0 0.0
        %1996 = vmatpush1.xpose.msra.mxu0 %v1175
        %1997 = vmatprep.subr.mxu0 0.0
        %1998 = vmatpush1.xpose.msra.mxu0 %v1177
        %1999 = vmatprep.subr.mxu0 0.0
        %2000 = vmatpush1.xpose.msra.mxu0 %v1179
        %2001 = vmatprep.subr.mxu0 0.0
        %2002 = vmatpush1.xpose.msra.mxu0 %v1181
        %2003 = vmatprep.subr.mxu0 0.0
        %2004 = vmatpush1.xpose.msra.mxu0 %v1183
        %2005 = vmatprep.mubr.f32.mxu0 0.0
        %2006 = vmatmul.mubr.f32.gmra.mrb[0].mxu0 %v1939
        %v2007 = vpop.f32.mrb[0].mxu0
        %v2008 = vadd.f32 0.0, %v2007
        %v2009 = vpop.f32.mrb[0].mxu0
        %v2010 = vadd.f32 0.0, %v2009
        %2011 = vdwg.mxu0
        %v2012 = vadd.f32 %v1929, %v2008
        %v2013 = vadd.f32 %v1930, %v2010
        %v2014 = vmul.f32 %v1621, %v1621
        %2016 = vrot.lane.b32.xlu0 %v2014, 125
        %v2017 = vpop.permute.xlu0 %2016
        %v2018 = vsel %vm486, %v2017, 0
        %2020 = vmatprep.subr.mxu0 0.0
        %2021 = vmatpush1.xpose.msra.mxu0 %v1328
        %2022 = vmatprep.subr.mxu0 0.0
        %2023 = vmatpush1.xpose.msra.mxu0 %v1330
        %2024 = vmatprep.subr.mxu0 0.0
        %2025 = vmatpush1.xpose.msra.mxu0 %v1332
        %2026 = vmatprep.subr.mxu0 0.0
        %2027 = vmatpush1.xpose.msra.mxu0 %v1334
        %2028 = vmatprep.subr.mxu0 0.0
        %2029 = vmatpush1.xpose.msra.mxu0 %v1336
        %2030 = vmatprep.subr.mxu0 0.0
        %2031 = vmatpush1.xpose.msra.mxu0 %v1338
        %2032 = vmatprep.subr.mxu0 0.0
        %2033 = vmatpush1.xpose.msra.mxu0 %v1340
        %2034 = vmatprep.subr.mxu0 0.0
        %2035 = vmatpush1.xpose.msra.mxu0 %v1342
        %2036 = vmatprep.subr.mxu0 0.0
        %2037 = vmatpush1.xpose.msra.mxu0 %v1344
        %2038 = vmatprep.subr.mxu0 0.0
        %2039 = vmatpush1.xpose.msra.mxu0 %v1346
        %2040 = vmatprep.subr.mxu0 0.0
        %2041 = vmatpush1.xpose.msra.mxu0 %v1348
        %2042 = vmatprep.subr.mxu0 0.0
        %2043 = vmatpush1.xpose.msra.mxu0 %v1350
        %2044 = vmatprep.subr.mxu0 0.0
        %2045 = vmatpush1.xpose.msra.mxu0 %v1352
        %2046 = vmatprep.subr.mxu0 0.0
        %2047 = vmatpush1.xpose.msra.mxu0 %v1354
        %2048 = vmatprep.subr.mxu0 0.0
        %2049 = vmatpush1.xpose.msra.mxu0 %v1356
        %2050 = vmatprep.subr.mxu0 0.0
        %2051 = vmatpush1.xpose.msra.mxu0 %v1358
        %2052 = vmatprep.subr.mxu0 0.0
        %2053 = vmatpush1.xpose.msra.mxu0 %v1360
        %2054 = vmatprep.subr.mxu0 0.0
        %2055 = vmatpush1.xpose.msra.mxu0 %v1362
        %2056 = vmatprep.subr.mxu0 0.0
        %2057 = vmatpush1.xpose.msra.mxu0 %v1364
        %2058 = vmatprep.subr.mxu0 0.0
        %2059 = vmatpush1.xpose.msra.mxu0 %v1366
        %2060 = vmatprep.subr.mxu0 0.0
        %2061 = vmatpush1.xpose.msra.mxu0 %v1368
        %2062 = vmatprep.subr.mxu0 0.0
        %2063 = vmatpush1.xpose.msra.mxu0 %v1370
        %2064 = vmatprep.subr.mxu0 0.0
        %2065 = vmatpush1.xpose.msra.mxu0 %v1372
        %2066 = vmatprep.subr.mxu0 0.0
        %2067 = vmatpush1.xpose.msra.mxu0 %v1374
        %2068 = vmatprep.subr.mxu0 0.0
        %2069 = vmatpush1.xpose.msra.mxu0 %v1376
        %2070 = vmatprep.subr.mxu0 0.0
        %2071 = vmatpush1.xpose.msra.mxu0 %v1378
        %2072 = vmatprep.subr.mxu0 0.0
        %2073 = vmatpush1.xpose.msra.mxu0 %v1380
        %2074 = vmatprep.subr.mxu0 0.0
        %2075 = vmatpush1.xpose.msra.mxu0 %v1382
        %2076 = vmatprep.subr.mxu0 0.0
        %2077 = vmatpush1.xpose.msra.mxu0 %v1384
        %2078 = vmatprep.subr.mxu0 0.0
        %2079 = vmatpush1.xpose.msra.mxu0 %v1386
        %2080 = vmatprep.subr.mxu0 0.0
        %2081 = vmatpush1.xpose.msra.mxu0 %v1388
        %2082 = vmatprep.subr.mxu0 0.0
        %2083 = vmatpush1.xpose.msra.mxu0 %v1390
        %2084 = vmatprep.mubr.f32.mxu0 0.0
        %2085 = vmatmul.mubr.f32.gmra.mrb[0].mxu0 %v2018
        %v2086 = vpop.f32.mrb[0].mxu0
        %v2087 = vadd.f32 0.0, %v2086
        %v2088 = vpop.f32.mrb[0].mxu0
        %v2089 = vadd.f32 0.0, %v2088
        %2090 = vdwg.mxu0
        %v2091 = vadd.f32 %v2012, %v2087
        %v2092 = vadd.f32 %v2013, %v2089
        %v2093 = vadd.f32 %v2091, %v2092
        %2094 = vadd.xlane.f32.xlu0 %v2093
        %v2095 = vpop.xlane.xlu0 %2094
        %v2096 = vmul.f32 %v2095, 0.00390625
        %v2097 = vsub.f32 %v2091, %v2096
        %v2098 = vsub.f32 %v2092, %v2096
        %2099 = vmatprep.subr.mxu0 %v2098
        %2100 = vmatpush1.xpose.msra.mxu0 %v2097
        %2101 = vmatprep.subr.mxu0 0.0
        %2102 = vmatpush1.xpose.msra.mxu0 0.0
        %2103 = vmatprep.subr.mxu0 0.0
        %2104 = vmatpush1.xpose.msra.mxu0 0.0
        %2105 = vmatprep.subr.mxu0 0.0
        %2106 = vmatpush1.xpose.msra.mxu0 0.0
        %2107 = vmatprep.subr.mxu0 0.0
        %2108 = vmatpush1.xpose.msra.mxu0 0.0
        %2109 = vmatprep.subr.mxu0 0.0
        %2110 = vmatpush1.xpose.msra.mxu0 0.0
        %2111 = vmatprep.subr.mxu0 0.0
        %2112 = vmatpush1.xpose.msra.mxu0 0.0
        %2113 = vmatprep.subr.mxu0 0.0
        %2114 = vmatpush1.xpose.msra.mxu0 0.0
        %2115 = vmatprep.subr.mxu0 0.0
        %2116 = vmatpush1.xpose.msra.mxu0 0.0
        %2117 = vmatprep.subr.mxu0 0.0
        %2118 = vmatpush1.xpose.msra.mxu0 0.0
        %2119 = vmatprep.subr.mxu0 0.0
        %2120 = vmatpush1.xpose.msra.mxu0 0.0
        %2121 = vmatprep.subr.mxu0 0.0
        %2122 = vmatpush1.xpose.msra.mxu0 0.0
        %2123 = vmatprep.subr.mxu0 0.0
        %2124 = vmatpush1.xpose.msra.mxu0 0.0
        %2125 = vmatprep.subr.mxu0 0.0
        %2126 = vmatpush1.xpose.msra.mxu0 0.0
        %2127 = vmatprep.subr.mxu0 0.0
        %2128 = vmatpush1.xpose.msra.mxu0 0.0
        %2129 = vmatprep.subr.mxu0 0.0
        %2130 = vmatpush1.xpose.msra.mxu0 0.0
        %2131 = vmatprep.subr.mxu0 0.0
        %2132 = vmatpush1.xpose.msra.mxu0 0.0
        %2133 = vmatprep.subr.mxu0 0.0
        %2134 = vmatpush1.xpose.msra.mxu0 0.0
        %2135 = vmatprep.subr.mxu0 0.0
        %2136 = vmatpush1.xpose.msra.mxu0 0.0
        %2137 = vmatprep.subr.mxu0 0.0
        %2138 = vmatpush1.xpose.msra.mxu0 0.0
        %2139 = vmatprep.subr.mxu0 0.0
        %2140 = vmatpush1.xpose.msra.mxu0 0.0
        %2141 = vmatprep.subr.mxu0 0.0
        %2142 = vmatpush1.xpose.msra.mxu0 0.0
        %2143 = vmatprep.subr.mxu0 0.0
        %2144 = vmatpush1.xpose.msra.mxu0 0.0
        %2145 = vmatprep.subr.mxu0 0.0
        %2146 = vmatpush1.xpose.msra.mxu0 0.0
        %2147 = vmatprep.subr.mxu0 0.0
        %2148 = vmatpush1.xpose.msra.mxu0 0.0
        %2149 = vmatprep.subr.mxu0 0.0
        %2150 = vmatpush1.xpose.msra.mxu0 0.0
        %2151 = vmatprep.subr.mxu0 0.0
        %2152 = vmatpush1.xpose.msra.mxu0 0.0
        %2153 = vmatprep.subr.mxu0 0.0
        %2154 = vmatpush1.xpose.msra.mxu0 0.0
        %2155 = vmatprep.subr.mxu0 0.0
        %2156 = vmatpush1.xpose.msra.mxu0 0.0
        %2157 = vmatprep.subr.mxu0 0.0
        %2158 = vmatpush1.xpose.msra.mxu0 0.0
        %2159 = vmatprep.subr.mxu0 0.0
        %2160 = vmatpush1.xpose.msra.mxu0 0.0
        %2161 = vmatprep.subr.mxu0 0.0
        %2162 = vmatpush1.xpose.msra.mxu0 0.0
        %2163 = vmatprep.mubr.f32.mxu0 %v2098
        %2164 = vmatmul.mubr.f32.gmra.mrb[0].mxu0 %v2097
        %v2165 = vpop.f32.mrb[0].mxu0
        %v2166 = vadd.f32 0.0, %v2165
        %v2167 = vpop.f32.mrb[0].mxu0
        %2168 = vdwg.mxu0
        %v2169 = vmul.f32 %v2166, 0.003921569
        %v2170 = vadd.f32 %v2169, %v1542
        %v2171 = vsel %vm249, %v2170, %v2169
        %s2172 = scalar_lea.vmem %s203, 8 [#allocation5]
        %2173 = vst.msk [vmem:[%s2172] sm:$0xff] %vm1545, %v2171
        %2174 = vmatprep.subr.mxu0 %v2092
        %2175 = vmatpush1.xpose.msra.mxu0 %v2091
        %2176 = vmatprep.subr.mxu0 0.0
        %2177 = vmatpush1.xpose.msra.mxu0 0.0
        %2178 = vmatprep.subr.mxu0 0.0
        %2179 = vmatpush1.xpose.msra.mxu0 0.0
        %2180 = vmatprep.subr.mxu0 0.0
        %2181 = vmatpush1.xpose.msra.mxu0 0.0
        %2182 = vmatprep.subr.mxu0 0.0
        %2183 = vmatpush1.xpose.msra.mxu0 0.0
        %2184 = vmatprep.subr.mxu0 0.0
        %2185 = vmatpush1.xpose.msra.mxu0 0.0
        %2186 = vmatprep.subr.mxu0 0.0
        %2187 = vmatpush1.xpose.msra.mxu0 0.0
        %2188 = vmatprep.subr.mxu0 0.0
        %2189 = vmatpush1.xpose.msra.mxu0 0.0
        %2190 = vmatprep.subr.mxu0 0.0
        %2191 = vmatpush1.xpose.msra.mxu0 0.0
        %2192 = vmatprep.subr.mxu0 0.0
        %2193 = vmatpush1.xpose.msra.mxu0 0.0
        %2194 = vmatprep.subr.mxu0 0.0
        %2195 = vmatpush1.xpose.msra.mxu0 0.0
        %2196 = vmatprep.subr.mxu0 0.0
        %2197 = vmatpush1.xpose.msra.mxu0 0.0
        %2198 = vmatprep.subr.mxu0 0.0
        %2199 = vmatpush1.xpose.msra.mxu0 0.0
        %2200 = vmatprep.subr.mxu0 0.0
        %2201 = vmatpush1.xpose.msra.mxu0 0.0
        %2202 = vmatprep.subr.mxu0 0.0
        %2203 = vmatpush1.xpose.msra.mxu0 0.0
        %2204 = vmatprep.subr.mxu0 0.0
        %2205 = vmatpush1.xpose.msra.mxu0 0.0
        %2206 = vmatprep.subr.mxu0 0.0
        %2207 = vmatpush1.xpose.msra.mxu0 0.0
        %2208 = vmatprep.subr.mxu0 0.0
        %2209 = vmatpush1.xpose.msra.mxu0 0.0
        %2210 = vmatprep.subr.mxu0 0.0
        %2211 = vmatpush1.xpose.msra.mxu0 0.0
        %2212 = vmatprep.subr.mxu0 0.0
        %2213 = vmatpush1.xpose.msra.mxu0 0.0
        %2214 = vmatprep.subr.mxu0 0.0
        %2215 = vmatpush1.xpose.msra.mxu0 0.0
        %2216 = vmatprep.subr.mxu0 0.0
        %2217 = vmatpush1.xpose.msra.mxu0 0.0
        %2218 = vmatprep.subr.mxu0 0.0
        %2219 = vmatpush1.xpose.msra.mxu0 0.0
        %2220 = vmatprep.subr.mxu0 0.0
        %2221 = vmatpush1.xpose.msra.mxu0 0.0
        %2222 = vmatprep.subr.mxu0 0.0
        %2223 = vmatpush1.xpose.msra.mxu0 0.0
        %2224 = vmatprep.subr.mxu0 0.0
        %2225 = vmatpush1.xpose.msra.mxu0 0.0
        %2226 = vmatprep.subr.mxu0 0.0
        %2227 = vmatpush1.xpose.msra.mxu0 0.0
        %2228 = vmatprep.subr.mxu0 0.0
        %2229 = vmatpush1.xpose.msra.mxu0 0.0
        %2230 = vmatprep.subr.mxu0 0.0
        %2231 = vmatpush1.xpose.msra.mxu0 0.0
        %2232 = vmatprep.subr.mxu0 0.0
        %2233 = vmatpush1.xpose.msra.mxu0 0.0
        %2234 = vmatprep.subr.mxu0 0.0
        %2235 = vmatpush1.xpose.msra.mxu0 0.0
        %2236 = vmatprep.subr.mxu0 0.0
        %2237 = vmatpush1.xpose.msra.mxu0 0.0
        %2238 = vmatprep.mubr.f32.mxu0 1.0
        %2239 = vmatmul.mubr.f32.gmra.mrb[0].mxu0 1.0
        %v2240 = vpop.f32.mrb[0].mxu0
        %v2241 = vadd.f32 0.0, %v2240
        %v2242 = vpop.f32.mrb[0].mxu0
        %2243 = vdwg.mxu0
        %v2244 = vmul.f32 %v2241, 0.00390625
        %s2245 = scalar_lea.vmem %s196, 1 [#allocation3]
        %2246 = vst.msk [vmem:[%s2245] sm:$0x1] %vm1618, %v2244
        %s2247 = sand.u32 %s99, 1
        %s2248 = scalar_lea.sflag [#allocation4], %s2247
        %s2249 = sand.u32 %s99, 1
        %s2250 = smul.addr %s2249, 2
        %s2251 = scalar_lea.vmem [#allocation3], %s2250
        %s2252 = sand.u32 %s125, 1
        %s2253 = scalar_lea.sflag [#allocation6], %s2252
        %s2254 = sand.u32 %s125, 1
        %s2255 = smul.addr %s2254, 16
        %s2256 = scalar_lea.vmem [#allocation5], %s2255
        // Predicated region
        $region33: #{tpu_custom_call.1} parent=31 // pred_check
          %p2257 = pneg %p109
        $region34: #{tpu_custom_call.1} parent=31 // pred_check_branch
          %2259 = sbr.rel (%p2257) target = $region36
        $region35: #{tpu_custom_call.1} parent=31 // pred_region
          %s2260 = smul.u32 2, %s23
          %s2262 = ssub.s32 32, 32
          %2263 = vsyncadd %s2248, %s2262
          %s2264 = smul.addr %s2260, 16
          %s2265 = scalar_lea.hbm %s3, %s2264
          %s2266 = sshll.u32 %s2251, 4
          %s2267 = int_to_ptr.vmem [resolvable:$true] %s2266
          %2272 = dma.vmem_to_hbm [thread:$0]  %s2267, 32, %s2265, %s2248, 16, 16, 1
        $region36: #{tpu_custom_call.1} parent=31 // pred_fallthru
          _
        // Predicated region
        $region37: #{tpu_custom_call.1} parent=31 // pred_check
          %p2273 = pneg %p135
        $region38: #{tpu_custom_call.1} parent=31 // pred_check_branch
          %2275 = sbr.rel (%p2273) target = $region40
        $region39: #{tpu_custom_call.1} parent=31 // pred_region
          %s2276 = smul.u32 2, %s23
          %s2278 = ssub.s32 256, 256
          %2279 = vsyncadd %s2253, %s2278
          %s2280 = smul.addr %s2276, 128
          %s2281 = scalar_lea.hbm %s4, %s2280
          %s2282 = sshll.u32 %s2256, 4
          %s2283 = int_to_ptr.vmem [resolvable:$true] %s2282
          %2288 = dma.vmem_to_hbm [thread:$0]  %s2283, 256, %s2281, %s2253, 128, 128, 8
        $region40: #{tpu_custom_call.1} parent=31 // pred_fallthru
          _
      $region32: #{tpu_custom_call.1} parent=5 // pred_fallthru
        _
      %p2289 = scmp.le.s32.totalorder 2, %s18
      // Predicated region
      $region41: #{tpu_custom_call.1} parent=5 // pred_check
        %p2290 = pneg %p2289
      $region42: #{tpu_custom_call.1} parent=5 // pred_check_branch
        %2292 = sbr.rel (%p2290) target = $region44
      $region43: #{tpu_custom_call.1} parent=5 // pred_region
        %s2293 = ssub.s32 %s18, 2
        // Predicated region
        $region45: #{tpu_custom_call.1} parent=43 // pred_check
          %p2294 = pneg %p115
        $region46: #{tpu_custom_call.1} parent=43 // pred_check_branch
          %2296 = sbr.rel (%p2294) target = $region48
        $region47: #{tpu_custom_call.1} parent=43 // pred_region
          %s2297 = sand.u32 %s100, 1
          %s2298 = scalar_lea.sflag [#allocation4], %s2297
          %s2299 = sand.u32 %s100, 1
          %s2300 = smul.addr %s2299, 2
          %s2301 = scalar_lea.vmem [#allocation3], %s2300
          %2302 = dma.done %s2298, 32
        $region48: #{tpu_custom_call.1} parent=43 // pred_fallthru
          _
        // Predicated region
        $region49: #{tpu_custom_call.1} parent=43 // pred_check
          %p2303 = pneg %p141
        $region50: #{tpu_custom_call.1} parent=43 // pred_check_branch
          %2305 = sbr.rel (%p2303) target = $region52
        $region51: #{tpu_custom_call.1} parent=43 // pred_region
          %s2306 = sand.u32 %s126, 1
          %s2307 = scalar_lea.sflag [#allocation6], %s2306
          %s2308 = sand.u32 %s126, 1
          %s2309 = smul.addr %s2308, 16
          %s2310 = scalar_lea.vmem [#allocation5], %s2309
          %2311 = dma.done %s2307, 256
        $region52: #{tpu_custom_call.1} parent=43 // pred_fallthru
          _
      $region44: #{tpu_custom_call.1} parent=5 // pred_fallthru
        _
    $region6: #{tpu_custom_call.1} parent=1 // loop_footer
      %s22 = sadd.s32 1, %s18
    $region7: #{tpu_custom_call.1} parent=1 // loop_footer_branch
      %17 = sbr.rel target = $region3
    $region8: #{tpu_custom_call.1} parent=1 // loop_exit
      _
    %2312 = vsyncpa [#allocation4], 1
    %s2313 = scalar_lea.sflag [#allocation4], 1
    %2314 = vsyncpa %s2313, 1
    %2315 = vsyncpa [#allocation6], 1
    %s2316 = scalar_lea.sflag [#allocation6], 1
    %2317 = vsyncpa %s2316, 1

</llo_original>
